<compile_context>
chip_gen: v5e
topology: v5e:2x2
jax: 0.10.0
libtpu: 0.0.40
codegen_flags: <defaults>
</compile_context>

<pallas_src>
import math

import jax
import jax.numpy as jnp
from jax import lax
from jax.experimental import pallas as pl
from jax.experimental.pallas import tpu as pltpu

_VMEM_LIMIT = 48 * 1024 * 1024  # fits v7x's 64 MiB physical VMEM with headroom


def _pick_tile(dim, candidates):
    """Largest candidate that evenly divides `dim`, else the full dim (small shapes)."""
    for c in candidates:
        if dim % c == 0:
            return c
    return dim


# --------------------------- tiled linear (MXU) -----------------------------

def _linear_kernel(x_ref, w_ref, b_ref, o_ref, acc_ref):
    @pl.when(pl.program_id(2) == 0)
    def _init():
        acc_ref[...] = jnp.zeros_like(acc_ref)

    acc_ref[...] += jnp.dot(x_ref[...], w_ref[...],
                            preferred_element_type=jnp.float32)

    @pl.when(pl.program_id(2) == pl.num_programs(2) - 1)
    def _store():
        o_ref[...] = (acc_ref[...] + b_ref[...]).astype(o_ref.dtype)


def linear_pallas(x2d, w, b):
    M, K = x2d.shape
    N = w.shape[1]
    # MXU-friendly tiles (256-multiples cover v6e/v7x 256x256, 128 covers v5e 128x128).
    tm = _pick_tile(M, (512, 256, 128))
    tn = _pick_tile(N, (512, 256, 128))
    tk = _pick_tile(K, (512, 256, 128))
    grid = (M // tm, N // tn, K // tk)
    return pl.pallas_call(
        _linear_kernel,
        out_shape=jax.ShapeDtypeStruct((M, N), jnp.float32),
        grid_spec=pltpu.PrefetchScalarGridSpec(
            num_scalar_prefetch=0,
            grid=grid,
            in_specs=[
                pl.BlockSpec((tm, tk), lambda i, j, k: (i, k)),
                pl.BlockSpec((tk, tn), lambda i, j, k: (k, j)),
                pl.BlockSpec((1, tn), lambda i, j, k: (0, j)),
            ],
            out_specs=pl.BlockSpec((tm, tn), lambda i, j, k: (i, j)),
            scratch_shapes=[pltpu.VMEM((tm, tn), jnp.float32)],
        ),
        compiler_params=pltpu.CompilerParams(
            dimension_semantics=("parallel", "parallel", "arbitrary"),
            vmem_limit_bytes=_VMEM_LIMIT,
        ),
    )(x2d, w, b.reshape(1, N))


# ----------------- causal flash attention with fused RoPE -------------------

def _flash_attn_kernel(q_ref, k_ref, v_ref, sinq_ref, cosq_ref, sink_ref, cosk_ref,
                       o_ref, m_sc, l_sc, acc_sc, qrot_sc):
    _, tq, hd = q_ref.shape
    _, tk, _ = k_ref.shape
    h2 = hd // 2
    qi = pl.program_id(1)
    kj = pl.program_id(2)
    q_start = qi * tq
    q_end = q_start + (tq - 1)
    kv_start = kj * tk
    kv_end = kv_start + (tk - 1)
    scale = 1.0 / math.sqrt(hd)

    @pl.when(kj == 0)
    def _init():
        m_sc[...] = jnp.full_like(m_sc, -1e30)
        l_sc[...] = jnp.zeros_like(l_sc)
        acc_sc[...] = jnp.zeros_like(acc_sc)
        # RoPE on the q tile, done once per q tile (cached in scratch across KV steps).
        # q/k arrive with each head's features already permuted to [even | odd] halves
        # (baked into the c_attn weights), so only contiguous half-slices are needed.
        q = q_ref[0]
        q1, q2 = q[:, :h2], q[:, h2:]
        cs, sn = cosq_ref[...], sinq_ref[...]
        qrot_sc[...] = jnp.concatenate(
            [q1 * cs - q2 * sn, q1 * sn + q2 * cs], axis=-1) * scale

    def _update(masked):
        k = k_ref[0]
        k1, k2 = k[:, :h2], k[:, h2:]
        cs, sn = cosk_ref[...], sink_ref[...]
        k_rot = jnp.concatenate([k1 * cs - k2 * sn, k1 * sn + k2 * cs], axis=-1)
        # Contract last dims directly: no explicit k transpose / relayout.
        s = lax.dot_general(qrot_sc[...], k_rot,
                            dimension_numbers=(((1,), (1,)), ((), ())),
                            preferred_element_type=jnp.float32)  # (tq, tk)
        if masked:  # only emitted for diagonal blocks
            row = q_start + lax.broadcasted_iota(jnp.int32, (tq, tk), 0)
            col = kv_start + lax.broadcasted_iota(jnp.int32, (tq, tk), 1)
            s = jnp.where(col <= row, s, -1e30)
        m_prev = m_sc[...]
        m_new = jnp.maximum(m_prev, jnp.max(s, axis=-1, keepdims=True))
        alpha = jnp.exp(m_prev - m_new)
        p = jnp.exp(s - m_new)
        l_sc[...] = alpha * l_sc[...] + jnp.sum(p, axis=-1, keepdims=True)
        acc_sc[...] = alpha * acc_sc[...] + jnp.dot(
            p, v_ref[0], preferred_element_type=jnp.float32)
        m_sc[...] = m_new

    fully_visible = kv_end <= q_start                      # below the diagonal: no mask
    diagonal = jnp.logical_and(kv_start <= q_end, kv_end > q_start)
    # KV blocks entirely above the diagonal are skipped (compute + softmax work saved).
    pl.when(fully_visible)(lambda: _update(False))
    pl.when(diagonal)(lambda: _update(True))

    @pl.when(kj == pl.num_programs(2) - 1)
    def _finalize():
        # reciprocal of the (tq,1) denominator then broadcast-multiply (not a full-tile
        # divide).  approx=False keeps 1e-4 parity; use approx=True when tolerable.
        inv_l = pl.reciprocal(l_sc[...], approx=False)
        o_ref[0] = (acc_sc[...] * inv_l).astype(o_ref.dtype)


def attention_pallas(q, k, v, sin, cos):
    # q, k, v: (B*H, T, hd); sin/cos: (T, hd//2).  q/k already head-permuted for RoPE.
    BH, T, hd = q.shape
    h2 = hd // 2
    tq = _pick_tile(T, (256, 128))
    tk = _pick_tile(T, (256, 128))
    nq, nk = T // tq, T // tk

    qspec = pl.BlockSpec((1, tq, hd), lambda bh, qi, kj: (bh, qi, 0))
    kvspec = pl.BlockSpec((1, tk, hd), lambda bh, qi, kj: (bh, kj, 0))
    sq_spec = pl.BlockSpec((tq, h2), lambda bh, qi, kj: (qi, 0))
    sk_spec = pl.BlockSpec((tk, h2), lambda bh, qi, kj: (kj, 0))

    return pl.pallas_call(
        _flash_attn_kernel,
        out_shape=jax.ShapeDtypeStruct((BH, T, hd), jnp.float32),
        grid_spec=pltpu.PrefetchScalarGridSpec(
            num_scalar_prefetch=0,
            grid=(BH, nq, nk),
            in_specs=[qspec, kvspec, kvspec, sq_spec, sq_spec, sk_spec, sk_spec],
            out_specs=qspec,
            scratch_shapes=[
                pltpu.VMEM((tq, 1), jnp.float32),   # m (running max)
                pltpu.VMEM((tq, 1), jnp.float32),   # l (running denom)
                pltpu.VMEM((tq, hd), jnp.float32),  # acc
                pltpu.VMEM((tq, hd), jnp.float32),  # RoPE'd + pre-scaled q tile
            ],
        ),
        compiler_params=pltpu.CompilerParams(
            dimension_semantics=("parallel", "parallel", "arbitrary"),
            vmem_limit_bytes=_VMEM_LIMIT,
        ),
    )(q, k, v, sin, cos, sin, cos)


# ------------------------------- JAX glue ----------------------------------

def rope_tables(T, head_dim):
    # Matches the PyTorch module: base 1000.0, pairs taken as (even, odd) strides.
    freqs = jnp.arange(0, head_dim, 2, dtype=jnp.float32) / head_dim
    theta = 1000.0 ** (-freqs)                       # (hd/2,)
    positions = jnp.arange(T, dtype=jnp.float32)     # (T,)
    angles = positions[:, None] * theta[None, :]     # (T, hd/2)
    return jnp.sin(angles), jnp.cos(angles)


def _rope_permutation(C, n_head):
    # Per head: [0,2,4,...,hd-2, 1,3,...,hd-1] -> concatenated even/odd halves.
    hd = C // n_head
    per_head = jnp.concatenate([jnp.arange(0, hd, 2, dtype=jnp.int32),
                                jnp.arange(1, hd, 2, dtype=jnp.int32)])
    return (jnp.arange(n_head, dtype=jnp.int32)[:, None] * hd
            + per_head[None, :]).reshape(-1)


def causal_self_attention_rope(x, params, n_head):
    B, T, C = x.shape
    hd = C // n_head

    # Bake the RoPE even/odd de-interleave into the q/k columns of c_attn so the
    # attention kernel sees contiguous halves (avoids stride-2 lane gathers in-kernel).
    perm = _rope_permutation(C, n_head)
    col_perm = jnp.concatenate([perm, C + perm, 2 * C + jnp.arange(C, dtype=jnp.int32)])
    w_attn = params["w_attn"][:, col_perm]
    b_attn = params["b_attn"][col_perm]

    # c_attn (tiled, pipelined)
    qkv = linear_pallas(x.reshape(B * T, C), w_attn, b_attn)      # (B*T, 3C)
    qkv = qkv.reshape(B, T, 3, n_head, hd)
    # TODO(synk): head split/transpose kept as XLA glue; indexing heads directly from the
    # (B,T,3C) buffer would need sub-128 lane blocks, which violates TPU BlockSpec tiling.
    q = qkv[:, :, 0].transpose(0, 2, 1, 3).reshape(B * n_head, T, hd)
    k = qkv[:, :, 1].transpose(0, 2, 1, 3).reshape(B * n_head, T, hd)
    v = qkv[:, :, 2].transpose(0, 2, 1, 3).reshape(B * n_head, T, hd)

    sin, cos = rope_tables(T, hd)

    # causal flash attention with fused RoPE (dropouts are identity in eval mode)
    y = attention_pallas(q, k, v, sin, cos)                        # (B*H, T, hd)
    y = y.reshape(B, n_head, T, hd).transpose(0, 2, 1, 3).reshape(B, T, C)

    # c_proj (tiled, pipelined)
    y = linear_pallas(y.reshape(B * T, C), params["w_proj"], params["b_proj"])
    return y.reshape(B, T, C)


# ------------------------------ Reference ----------------------------------

def apply_rope_ref(x, sin, cos):
    x1 = x[..., 0::2]
    x2 = x[..., 1::2]
    return jnp.concatenate([x1 * cos - x2 * sin, x1 * sin + x2 * cos], axis=-1)


def reference(x, params, n_head):
    B, T, C = x.shape
    hd = C // n_head
    qkv = x @ params["w_attn"] + params["b_attn"]
    q, k, v = jnp.split(qkv, 3, axis=-1)
    q = q.reshape(B, T, n_head, hd).transpose(0, 2, 1, 3)
    k = k.reshape(B, T, n_head, hd).transpose(0, 2, 1, 3)
    v = v.reshape(B, T, n_head, hd).transpose(0, 2, 1, 3)
    sin, cos = rope_tables(T, hd)
    q = apply_rope_ref(q, sin, cos)
    k = apply_rope_ref(k, sin, cos)
    s = jnp.einsum("bhqd,bhkd->bhqk", q, k) / math.sqrt(hd)
    mask = jnp.tril(jnp.ones((T, T), dtype=bool))
    s = jnp.where(mask, s, -jnp.inf)
    p = jax.nn.softmax(s, axis=-1)
    y = jnp.einsum("bhqk,bhkd->bhqd", p, v)
    y = y.transpose(0, 2, 1, 3).reshape(B, T, C)
    return y @ params["w_proj"] + params["b_proj"]


# -------------------------------- Main --------------------------------------

def init_params(key, n_embd):
    # PyTorch nn.Linear default init: U(-1/sqrt(fan_in), 1/sqrt(fan_in)).
    k1, k2, k3, k4 = jax.random.split(key, 4)
    bound = 1.0 / math.sqrt(n_embd)
    return {
        # stored as (in, out) so the kernel computes x @ w + b
        "w_attn": jax.random.uniform(k1, (n_embd, 3 * n_embd), jnp.float32, -bound, bound),
        "b_attn": jax.random.uniform(k2, (3 * n_embd,), jnp.float32, -bound, bound),
        "w_proj": jax.random.uniform(k3, (n_embd, n_embd), jnp.float32, -bound, bound),
        "b_proj": jax.random.uniform(k4, (n_embd,), jnp.float32, -bound, bound),
    }


if __name__ == "__main__":
    B, T, C, n_head = 2, 8, 32, 4

    key = jax.random.PRNGKey(0)
    kx, kp = jax.random.split(key)
    x = jax.random.normal(kx, (B, T, C), dtype=jnp.float32)
    params = init_params(kp, C)

    fwd = jax.jit(causal_self_attention_rope, static_argnums=2)
    y = jax.block_until_ready(fwd(x, params, n_head))

    y_ref = jax.block_until_ready(reference(x, params, n_head))
    assert y.shape == (B, T, C)
    assert jnp.allclose(y, y_ref, atol=1e-4, rtol=1e-4), (
        f"max abs diff {jnp.max(jnp.abs(y - y_ref))}"
    )

    print("KERNEL_OK")
</pallas_src>

<mosaic_0001>
module attributes {stable_mosaic.version = 11 : i64} {
  func.func @_linear_kernel(%arg0: i32, %arg1: i32, %arg2: i32, %arg3: memref<16x32xf32, #tpu.memory_space<vmem>>, %arg4: memref<32x96xf32, #tpu.memory_space<vmem>>, %arg5: memref<1x96xf32, #tpu.memory_space<vmem>>, %arg6: memref<16x96xf32, #tpu.memory_space<vmem>>, %arg7: memref<16x96xf32, #tpu.memory_space<vmem>>) attributes {dimension_semantics = [#tpu.dimension_semantics<parallel>, #tpu.dimension_semantics<parallel>, #tpu.dimension_semantics<arbitrary>], iteration_bounds = array<i64: 1, 1, 1>, scalar_prefetch = 0 : i64, scratch_operands = 1 : i64, tpu.core_type = #tpu.core_type<tc>, window_params = [{transform_indices = @transform_0, window_bounds = array<i64: 16, 32>}, {transform_indices = @transform_1, window_bounds = array<i64: 32, 96>}, {transform_indices = @transform_2, window_bounds = array<i64: 1, 96>}, {transform_indices = @transform_3, window_bounds = array<i64: 16, 96>}]} {
    %c0_i32 = arith.constant 0 : i32
    %0 = arith.cmpi eq, %arg2, %c0_i32 : i32
    %1 = arith.extui %0 : i1 to i32
    %c0_i32_0 = arith.constant 0 : i32
    %2 = arith.cmpi ne, %1, %c0_i32_0 : i32
    scf.if %2 {
      %cst_10 = arith.constant 0.000000e+00 : f32
      %12 = vector.broadcast %cst_10 : f32 to vector<16x96xf32>
      %c0_11 = arith.constant 0 : index
      %c0_12 = arith.constant 0 : index
      %13 = vector.load %arg7[%c0_11, %c0_12] : memref<16x96xf32, #tpu.memory_space<vmem>>, vector<16x96xf32>
      tpu.vector_store %arg7[%c0_11, %c0_12], %12 {strides = array<i32>} : memref<16x96xf32, #tpu.memory_space<vmem>>, vector<16x96xf32>,
    } else {
    }
    %c0 = arith.constant 0 : index
    %c0_1 = arith.constant 0 : index
    %3 = vector.load %arg7[%c0, %c0_1] : memref<16x96xf32, #tpu.memory_space<vmem>>, vector<16x96xf32>
    %c0_2 = arith.constant 0 : index
    %c0_3 = arith.constant 0 : index
    %4 = vector.load %arg3[%c0_2, %c0_3] : memref<16x32xf32, #tpu.memory_space<vmem>>, vector<16x32xf32>
    %c0_4 = arith.constant 0 : index
    %c0_5 = arith.constant 0 : index
    %5 = vector.load %arg4[%c0_4, %c0_5] : memref<32x96xf32, #tpu.memory_space<vmem>>, vector<32x96xf32>
    %cst = arith.constant dense<0.000000e+00> : vector<16x96xf32>
    %6 = tpu.matmul %4, %5, %cst {dimension_numbers = #tpu.dot_dimension_numbers<[1], [0], [0], [1], [0, 0, 1, 1], [], []>} : vector<16x32xf32>, vector<32x96xf32>, vector<16x96xf32> -> vector<16x96xf32>
    %7 = arith.addf %3, %6 : vector<16x96xf32>
    %c0_6 = arith.constant 0 : index
    %c0_7 = arith.constant 0 : index
    %8 = vector.load %arg7[%c0_6, %c0_7] : memref<16x96xf32, #tpu.memory_space<vmem>>, vector<16x96xf32>
    tpu.vector_store %arg7[%c0_6, %c0_7], %7 {strides = array<i32>} : memref<16x96xf32, #tpu.memory_space<vmem>>, vector<16x96xf32>,
    %c0_i32_8 = arith.constant 0 : i32
    %9 = arith.cmpi eq, %arg2, %c0_i32_8 : i32
    %10 = arith.extui %9 : i1 to i32
    %c0_i32_9 = arith.constant 0 : i32
    %11 = arith.cmpi ne, %10, %c0_i32_9 : i32
    scf.if %11 {
      %c0_10 = arith.constant 0 : index
      %c0_11 = arith.constant 0 : index
      %12 = vector.load %arg7[%c0_10, %c0_11] : memref<16x96xf32, #tpu.memory_space<vmem>>, vector<16x96xf32>
      %c0_12 = arith.constant 0 : index
      %c0_13 = arith.constant 0 : index
      %13 = vector.load %arg5[%c0_12, %c0_13] : memref<1x96xf32, #tpu.memory_space<vmem>>, vector<1x96xf32>
      %14 = vector.broadcast %13 : vector<1x96xf32> to vector<16x96xf32>
      %15 = arith.addf %12, %14 : vector<16x96xf32>
      %c0_14 = arith.constant 0 : index
      %c0_15 = arith.constant 0 : index
      %16 = vector.load %arg6[%c0_14, %c0_15] : memref<16x96xf32, #tpu.memory_space<vmem>>, vector<16x96xf32>
      tpu.vector_store %arg6[%c0_14, %c0_15], %15 {strides = array<i32>} : memref<16x96xf32, #tpu.memory_space<vmem>>, vector<16x96xf32>,
    } else {
    }
    return
  }
  func.func @transform_0(%arg0: i32, %arg1: i32, %arg2: i32) -> (i32, i32) {
    %c0_i32 = arith.constant 0 : i32
    return %arg0, %arg2 : i32, i32
  }
  func.func @transform_1(%arg0: i32, %arg1: i32, %arg2: i32) -> (i32, i32) {
    %c0_i32 = arith.constant 0 : i32
    return %arg2, %arg1 : i32, i32
  }
  func.func @transform_2(%arg0: i32, %arg1: i32, %arg2: i32) -> (i32, i32) {
    %c0_i32 = arith.constant 0 : i32
    %c0_i32_0 = arith.constant 0 : i32
    return %c0_i32, %arg1 : i32, i32
  }
  func.func @transform_3(%arg0: i32, %arg1: i32, %arg2: i32) -> (i32, i32) {
    %c0_i32 = arith.constant 0 : i32
    return %arg0, %arg1 : i32, i32
  }
}

module attributes {stable_mosaic.version = 11 : i64} {
  func.func @_flash_attn_kernel(%arg0: i32, %arg1: i32, %arg2: i32, %arg3: memref<1x8x8xf32, #tpu.memory_space<vmem>>, %arg4: memref<1x8x8xf32, #tpu.memory_space<vmem>>, %arg5: memref<1x8x8xf32, #tpu.memory_space<vmem>>, %arg6: memref<8x4xf32, #tpu.memory_space<vmem>>, %arg7: memref<8x4xf32, #tpu.memory_space<vmem>>, %arg8: memref<8x4xf32, #tpu.memory_space<vmem>>, %arg9: memref<8x4xf32, #tpu.memory_space<vmem>>, %arg10: memref<1x8x8xf32, #tpu.memory_space<vmem>>, %arg11: memref<8x1xf32, #tpu.memory_space<vmem>>, %arg12: memref<8x1xf32, #tpu.memory_space<vmem>>, %arg13: memref<8x8xf32, #tpu.memory_space<vmem>>, %arg14: memref<8x8xf32, #tpu.memory_space<vmem>>) attributes {dimension_semantics = [#tpu.dimension_semantics<parallel>, #tpu.dimension_semantics<parallel>, #tpu.dimension_semantics<arbitrary>], iteration_bounds = array<i64: 8, 1, 1>, scalar_prefetch = 0 : i64, scratch_operands = 4 : i64, tpu.core_type = #tpu.core_type<tc>, window_params = [{transform_indices = @transform_0, window_bounds = array<i64: 1, 8, 8>}, {transform_indices = @transform_1, window_bounds = array<i64: 1, 8, 8>}, {transform_indices = @transform_2, window_bounds = array<i64: 1, 8, 8>}, {transform_indices = @transform_3, window_bounds = array<i64: 8, 4>}, {transform_indices = @transform_4, window_bounds = array<i64: 8, 4>}, {transform_indices = @transform_5, window_bounds = array<i64: 8, 4>}, {transform_indices = @transform_6, window_bounds = array<i64: 8, 4>}, {transform_indices = @transform_7, window_bounds = array<i64: 1, 8, 8>}]} {
    %c8_i32 = arith.constant 8 : i32
    %0 = arith.muli %arg1, %c8_i32 : i32
    %c7_i32 = arith.constant 7 : i32
    %1 = arith.addi %0, %c7_i32 : i32
    %c8_i32_0 = arith.constant 8 : i32
    %2 = arith.muli %arg2, %c8_i32_0 : i32
    %c7_i32_1 = arith.constant 7 : i32
    %3 = arith.addi %2, %c7_i32_1 : i32
    %c0_i32 = arith.constant 0 : i32
    %4 = arith.cmpi eq, %arg2, %c0_i32 : i32
    %5 = arith.extui %4 : i1 to i32
    %c0_i32_2 = arith.constant 0 : i32
    %6 = arith.cmpi ne, %5, %c0_i32_2 : i32
    scf.if %6 {
      %cst = arith.constant -1.000000e+30 : f32
      %18 = vector.broadcast %cst : f32 to vector<8x1xf32>
      %c0 = arith.constant 0 : index
      %c0_7 = arith.constant 0 : index
      %19 = vector.load %arg11[%c0, %c0_7] : memref<8x1xf32, #tpu.memory_space<vmem>>, vector<8x1xf32>
      tpu.vector_store %arg11[%c0, %c0_7], %18 {strides = array<i32>} : memref<8x1xf32, #tpu.memory_space<vmem>>, vector<8x1xf32>,
      %cst_8 = arith.constant 0.000000e+00 : f32
      %20 = vector.broadcast %cst_8 : f32 to vector<8x1xf32>
      %c0_9 = arith.constant 0 : index
      %c0_10 = arith.constant 0 : index
      %21 = vector.load %arg12[%c0_9, %c0_10] : memref<8x1xf32, #tpu.memory_space<vmem>>, vector<8x1xf32>
      tpu.vector_store %arg12[%c0_9, %c0_10], %20 {strides = array<i32>} : memref<8x1xf32, #tpu.memory_space<vmem>>, vector<8x1xf32>,
      %cst_11 = arith.constant 0.000000e+00 : f32
      %22 = vector.broadcast %cst_11 : f32 to vector<8x8xf32>
      %c0_12 = arith.constant 0 : index
      %c0_13 = arith.constant 0 : index
      %23 = vector.load %arg13[%c0_12, %c0_13] : memref<8x8xf32, #tpu.memory_space<vmem>>, vector<8x8xf32>
      tpu.vector_store %arg13[%c0_12, %c0_13], %22 {strides = array<i32>} : memref<8x8xf32, #tpu.memory_space<vmem>>, vector<8x8xf32>,
      %c0_14 = arith.constant 0 : index
      %c0_15 = arith.constant 0 : index
      %c0_16 = arith.constant 0 : index
      %24 = vector.load %arg3[%c0_14, %c0_15, %c0_16] : memref<1x8x8xf32, #tpu.memory_space<vmem>>, vector<1x8x8xf32>
      %25 = vector.shape_cast %24 : vector<1x8x8xf32> to vector<8x8xf32>
      %26 = vector.extract_strided_slice %25 {offsets = [0, 0], sizes = [8, 4], strides = [1, 1]} : vector<8x8xf32> to vector<8x4xf32>
      %27 = vector.extract_strided_slice %25 {offsets = [0, 4], sizes = [8, 4], strides = [1, 1]} : vector<8x8xf32> to vector<8x4xf32>
      %c0_17 = arith.constant 0 : index
      %c0_18 = arith.constant 0 : index
      %28 = vector.load %arg7[%c0_17, %c0_18] : memref<8x4xf32, #tpu.memory_space<vmem>>, vector<8x4xf32>
      %c0_19 = arith.constant 0 : index
      %c0_20 = arith.constant 0 : index
      %29 = vector.load %arg6[%c0_19, %c0_20] : memref<8x4xf32, #tpu.memory_space<vmem>>, vector<8x4xf32>
      %30 = arith.mulf %26, %28 : vector<8x4xf32>
      %31 = arith.mulf %27, %29 : vector<8x4xf32>
      %32 = arith.subf %30, %31 : vector<8x4xf32>
      %33 = arith.mulf %26, %29 : vector<8x4xf32>
      %34 = arith.mulf %27, %28 : vector<8x4xf32>
      %35 = arith.addf %33, %34 : vector<8x4xf32>
      %36 = tpu.concatenate %32, %35 in 1 : vector<8x4xf32>, vector<8x4xf32> -> vector<8x8xf32>
      %cst_21 = arith.constant 0.353553385 : f32
      %37 = vector.broadcast %cst_21 : f32 to vector<8x8xf32>
      %38 = arith.mulf %36, %37 : vector<8x8xf32>
      %c0_22 = arith.constant 0 : index
      %c0_23 = arith.constant 0 : index
      %39 = vector.load %arg14[%c0_22, %c0_23] : memref<8x8xf32, #tpu.memory_space<vmem>>, vector<8x8xf32>
      tpu.vector_store %arg14[%c0_22, %c0_23], %38 {strides = array<i32>} : memref<8x8xf32, #tpu.memory_space<vmem>>, vector<8x8xf32>,
    } else {
    }
    %7 = arith.cmpi sle, %3, %0 : i32
    %8 = arith.cmpi sle, %2, %1 : i32
    %9 = arith.cmpi sgt, %3, %0 : i32
    %10 = arith.andi %8, %9 : i1
    %11 = arith.extui %7 : i1 to i32
    %c0_i32_3 = arith.constant 0 : i32
    %12 = arith.cmpi ne, %11, %c0_i32_3 : i32
    scf.if %12 {
      %c0 = arith.constant 0 : index
      %c0_7 = arith.constant 0 : index
      %c0_8 = arith.constant 0 : index
      %18 = vector.load %arg4[%c0, %c0_7, %c0_8] : memref<1x8x8xf32, #tpu.memory_space<vmem>>, vector<1x8x8xf32>
      %19 = vector.shape_cast %18 : vector<1x8x8xf32> to vector<8x8xf32>
      %20 = vector.extract_strided_slice %19 {offsets = [0, 0], sizes = [8, 4], strides = [1, 1]} : vector<8x8xf32> to vector<8x4xf32>
      %21 = vector.extract_strided_slice %19 {offsets = [0, 4], sizes = [8, 4], strides = [1, 1]} : vector<8x8xf32> to vector<8x4xf32>
      %c0_9 = arith.constant 0 : index
      %c0_10 = arith.constant 0 : index
      %22 = vector.load %arg9[%c0_9, %c0_10] : memref<8x4xf32, #tpu.memory_space<vmem>>, vector<8x4xf32>
      %c0_11 = arith.constant 0 : index
      %c0_12 = arith.constant 0 : index
      %23 = vector.load %arg8[%c0_11, %c0_12] : memref<8x4xf32, #tpu.memory_space<vmem>>, vector<8x4xf32>
      %24 = arith.mulf %20, %22 : vector<8x4xf32>
      %25 = arith.mulf %21, %23 : vector<8x4xf32>
      %26 = arith.subf %24, %25 : vector<8x4xf32>
      %27 = arith.mulf %20, %23 : vector<8x4xf32>
      %28 = arith.mulf %21, %22 : vector<8x4xf32>
      %29 = arith.addf %27, %28 : vector<8x4xf32>
      %30 = tpu.concatenate %26, %29 in 1 : vector<8x4xf32>, vector<8x4xf32> -> vector<8x8xf32>
      %c0_13 = arith.constant 0 : index
      %c0_14 = arith.constant 0 : index
      %31 = vector.load %arg14[%c0_13, %c0_14] : memref<8x8xf32, #tpu.memory_space<vmem>>, vector<8x8xf32>
      %cst = arith.constant dense<0.000000e+00> : vector<8x8xf32>
      %32 = tpu.matmul %31, %30, %cst {dimension_numbers = #tpu.dot_dimension_numbers<[1], [1], [0], [0], [0, 0, 1, 0], [], []>} : vector<8x8xf32>, vector<8x8xf32>, vector<8x8xf32> -> vector<8x8xf32>
      %c0_15 = arith.constant 0 : index
      %c0_16 = arith.constant 0 : index
      %33 = vector.load %arg11[%c0_15, %c0_16] : memref<8x1xf32, #tpu.memory_space<vmem>>, vector<8x1xf32>
      %cst_17 = arith.constant dense<0xFF800000> : vector<8xf32>
      %34 = vector.multi_reduction <maximumf>, %32, %cst_17 [1] : vector<8x8xf32> to vector<8xf32>
      %35 = vector.shape_cast %34 : vector<8xf32> to vector<8x1xf32>
      %36 = arith.maximumf %33, %35 : vector<8x1xf32>
      %37 = arith.subf %33, %36 : vector<8x1xf32>
      %38 = math.exp %37 : vector<8x1xf32>
      %39 = vector.broadcast %36 : vector<8x1xf32> to vector<8x8xf32>
      %40 = arith.subf %32, %39 : vector<8x8xf32>
      %41 = math.exp %40 : vector<8x8xf32>
      %c0_18 = arith.constant 0 : index
      %c0_19 = arith.constant 0 : index
      %42 = vector.load %arg12[%c0_18, %c0_19] : memref<8x1xf32, #tpu.memory_space<vmem>>, vector<8x1xf32>
      %43 = arith.mulf %38, %42 : vector<8x1xf32>
      %cst_20 = arith.constant dense<0.000000e+00> : vector<8xf32>
      %44 = vector.multi_reduction <add>, %41, %cst_20 [1] : vector<8x8xf32> to vector<8xf32>
      %45 = vector.shape_cast %44 : vector<8xf32> to vector<8x1xf32>
      %46 = arith.addf %43, %45 : vector<8x1xf32>
      %c0_21 = arith.constant 0 : index
      %c0_22 = arith.constant 0 : index
      %47 = vector.load %arg12[%c0_21, %c0_22] : memref<8x1xf32, #tpu.memory_space<vmem>>, vector<8x1xf32>
      tpu.vector_store %arg12[%c0_21, %c0_22], %46 {strides = array<i32>} : memref<8x1xf32, #tpu.memory_space<vmem>>, vector<8x1xf32>,
      %c0_23 = arith.constant 0 : index
      %c0_24 = arith.constant 0 : index
      %48 = vector.load %arg13[%c0_23, %c0_24] : memref<8x8xf32, #tpu.memory_space<vmem>>, vector<8x8xf32>
      %49 = vector.broadcast %38 : vector<8x1xf32> to vector<8x8xf32>
      %50 = arith.mulf %49, %48 : vector<8x8xf32>
      %c0_25 = arith.constant 0 : index
      %c0_26 = arith.constant 0 : index
      %c0_27 = arith.constant 0 : index
      %51 = vector.load %arg5[%c0_25, %c0_26, %c0_27] : memref<1x8x8xf32, #tpu.memory_space<vmem>>, vector<1x8x8xf32>
      %52 = vector.shape_cast %51 : vector<1x8x8xf32> to vector<8x8xf32>
      %cst_28 = arith.constant dense<0.000000e+00> : vector<8x8xf32>
      %53 = tpu.matmul %41, %52, %cst_28 {dimension_numbers = #tpu.dot_dimension_numbers<[1], [0], [0], [1], [0, 0, 1, 1], [], []>} : vector<8x8xf32>, vector<8x8xf32>, vector<8x8xf32> -> vector<8x8xf32>
      %54 = arith.addf %50, %53 : vector<8x8xf32>
      %c0_29 = arith.constant 0 : index
      %c0_30 = arith.constant 0 : index
      %55 = vector.load %arg13[%c0_29, %c0_30] : memref<8x8xf32, #tpu.memory_space<vmem>>, vector<8x8xf32>
      tpu.vector_store %arg13[%c0_29, %c0_30], %54 {strides = array<i32>} : memref<8x8xf32, #tpu.memory_space<vmem>>, vector<8x8xf32>,
      %c0_31 = arith.constant 0 : index
      %c0_32 = arith.constant 0 : index
      %56 = vector.load %arg11[%c0_31, %c0_32] : memref<8x1xf32, #tpu.memory_space<vmem>>, vector<8x1xf32>
      tpu.vector_store %arg11[%c0_31, %c0_32], %36 {strides = array<i32>} : memref<8x1xf32, #tpu.memory_space<vmem>>, vector<8x1xf32>,
    } else {
    }
    %13 = arith.extui %10 : i1 to i32
    %c0_i32_4 = arith.constant 0 : i32
    %14 = arith.cmpi ne, %13, %c0_i32_4 : i32
    scf.if %14 {
      %c0 = arith.constant 0 : index
      %c0_7 = arith.constant 0 : index
      %c0_8 = arith.constant 0 : index
      %18 = vector.load %arg4[%c0, %c0_7, %c0_8] : memref<1x8x8xf32, #tpu.memory_space<vmem>>, vector<1x8x8xf32>
      %19 = vector.shape_cast %18 : vector<1x8x8xf32> to vector<8x8xf32>
      %20 = vector.extract_strided_slice %19 {offsets = [0, 0], sizes = [8, 4], strides = [1, 1]} : vector<8x8xf32> to vector<8x4xf32>
      %21 = vector.extract_strided_slice %19 {offsets = [0, 4], sizes = [8, 4], strides = [1, 1]} : vector<8x8xf32> to vector<8x4xf32>
      %c0_9 = arith.constant 0 : index
      %c0_10 = arith.constant 0 : index
      %22 = vector.load %arg9[%c0_9, %c0_10] : memref<8x4xf32, #tpu.memory_space<vmem>>, vector<8x4xf32>
      %c0_11 = arith.constant 0 : index
      %c0_12 = arith.constant 0 : index
      %23 = vector.load %arg8[%c0_11, %c0_12] : memref<8x4xf32, #tpu.memory_space<vmem>>, vector<8x4xf32>
      %24 = arith.mulf %20, %22 : vector<8x4xf32>
      %25 = arith.mulf %21, %23 : vector<8x4xf32>
      %26 = arith.subf %24, %25 : vector<8x4xf32>
      %27 = arith.mulf %20, %23 : vector<8x4xf32>
      %28 = arith.mulf %21, %22 : vector<8x4xf32>
      %29 = arith.addf %27, %28 : vector<8x4xf32>
      %30 = tpu.concatenate %26, %29 in 1 : vector<8x4xf32>, vector<8x4xf32> -> vector<8x8xf32>
      %c0_13 = arith.constant 0 : index
      %c0_14 = arith.constant 0 : index
      %31 = vector.load %arg14[%c0_13, %c0_14] : memref<8x8xf32, #tpu.memory_space<vmem>>, vector<8x8xf32>
      %cst = arith.constant dense<0.000000e+00> : vector<8x8xf32>
      %32 = tpu.matmul %31, %30, %cst {dimension_numbers = #tpu.dot_dimension_numbers<[1], [1], [0], [0], [0, 0, 1, 0], [], []>} : vector<8x8xf32>, vector<8x8xf32>, vector<8x8xf32> -> vector<8x8xf32>
      %33 = tpu.iota {dimensions = array<i32: 0>} : vector<8x8xi32>
      %34 = vector.broadcast %0 : i32 to vector<8x8xi32>
      %35 = arith.addi %34, %33 : vector<8x8xi32>
      %36 = tpu.iota {dimensions = array<i32: 1>} : vector<8x8xi32>
      %37 = vector.broadcast %2 : i32 to vector<8x8xi32>
      %38 = arith.addi %37, %36 : vector<8x8xi32>
      %39 = arith.cmpi sle, %38, %35 : vector<8x8xi32>
      %cst_15 = arith.constant -1.000000e+30 : f32
      %40 = vector.broadcast %cst_15 : f32 to vector<8x8xf32>
      %41 = arith.select %39, %32, %40 : vector<8x8xi1>, vector<8x8xf32>
      %c0_16 = arith.constant 0 : index
      %c0_17 = arith.constant 0 : index
      %42 = vector.load %arg11[%c0_16, %c0_17] : memref<8x1xf32, #tpu.memory_space<vmem>>, vector<8x1xf32>
      %cst_18 = arith.constant dense<0xFF800000> : vector<8xf32>
      %43 = vector.multi_reduction <maximumf>, %41, %cst_18 [1] : vector<8x8xf32> to vector<8xf32>
      %44 = vector.shape_cast %43 : vector<8xf32> to vector<8x1xf32>
      %45 = arith.maximumf %42, %44 : vector<8x1xf32>
      %46 = arith.subf %42, %45 : vector<8x1xf32>
      %47 = math.exp %46 : vector<8x1xf32>
      %48 = vector.broadcast %45 : vector<8x1xf32> to vector<8x8xf32>
      %49 = arith.subf %41, %48 : vector<8x8xf32>
      %50 = math.exp %49 : vector<8x8xf32>
      %c0_19 = arith.constant 0 : index
      %c0_20 = arith.constant 0 : index
      %51 = vector.load %arg12[%c0_19, %c0_20] : memref<8x1xf32, #tpu.memory_space<vmem>>, vector<8x1xf32>
      %52 = arith.mulf %47, %51 : vector<8x1xf32>
      %cst_21 = arith.constant dense<0.000000e+00> : vector<8xf32>
      %53 = vector.multi_reduction <add>, %50, %cst_21 [1] : vector<8x8xf32> to vector<8xf32>
      %54 = vector.shape_cast %53 : vector<8xf32> to vector<8x1xf32>
      %55 = arith.addf %52, %54 : vector<8x1xf32>
      %c0_22 = arith.constant 0 : index
      %c0_23 = arith.constant 0 : index
      %56 = vector.load %arg12[%c0_22, %c0_23] : memref<8x1xf32, #tpu.memory_space<vmem>>, vector<8x1xf32>
      tpu.vector_store %arg12[%c0_22, %c0_23], %55 {strides = array<i32>} : memref<8x1xf32, #tpu.memory_space<vmem>>, vector<8x1xf32>,
      %c0_24 = arith.constant 0 : index
      %c0_25 = arith.constant 0 : index
      %57 = vector.load %arg13[%c0_24, %c0_25] : memref<8x8xf32, #tpu.memory_space<vmem>>, vector<8x8xf32>
      %58 = vector.broadcast %47 : vector<8x1xf32> to vector<8x8xf32>
      %59 = arith.mulf %58, %57 : vector<8x8xf32>
      %c0_26 = arith.constant 0 : index
      %c0_27 = arith.constant 0 : index
      %c0_28 = arith.constant 0 : index
      %60 = vector.load %arg5[%c0_26, %c0_27, %c0_28] : memref<1x8x8xf32, #tpu.memory_space<vmem>>, vector<1x8x8xf32>
      %61 = vector.shape_cast %60 : vector<1x8x8xf32> to vector<8x8xf32>
      %cst_29 = arith.constant dense<0.000000e+00> : vector<8x8xf32>
      %62 = tpu.matmul %50, %61, %cst_29 {dimension_numbers = #tpu.dot_dimension_numbers<[1], [0], [0], [1], [0, 0, 1, 1], [], []>} : vector<8x8xf32>, vector<8x8xf32>, vector<8x8xf32> -> vector<8x8xf32>
      %63 = arith.addf %59, %62 : vector<8x8xf32>
      %c0_30 = arith.constant 0 : index
      %c0_31 = arith.constant 0 : index
      %64 = vector.load %arg13[%c0_30, %c0_31] : memref<8x8xf32, #tpu.memory_space<vmem>>, vector<8x8xf32>
      tpu.vector_store %arg13[%c0_30, %c0_31], %63 {strides = array<i32>} : memref<8x8xf32, #tpu.memory_space<vmem>>, vector<8x8xf32>,
      %c0_32 = arith.constant 0 : index
      %c0_33 = arith.constant 0 : index
      %65 = vector.load %arg11[%c0_32, %c0_33] : memref<8x1xf32, #tpu.memory_space<vmem>>, vector<8x1xf32>
      tpu.vector_store %arg11[%c0_32, %c0_33], %45 {strides = array<i32>} : memref<8x1xf32, #tpu.memory_space<vmem>>, vector<8x1xf32>,
    } else {
    }
    %c0_i32_5 = arith.constant 0 : i32
    %15 = arith.cmpi eq, %arg2, %c0_i32_5 : i32
    %16 = arith.extui %15 : i1 to i32
    %c0_i32_6 = arith.constant 0 : i32
    %17 = arith.cmpi ne, %16, %c0_i32_6 : i32
    scf.if %17 {
      %c0 = arith.constant 0 : index
      %c0_7 = arith.constant 0 : index
      %18 = vector.load %arg12[%c0, %c0_7] : memref<8x1xf32, #tpu.memory_space<vmem>>, vector<8x1xf32>
      %19 = tpu.reciprocal %18 : vector<8x1xf32> -> vector<8x1xf32>
      %c0_8 = arith.constant 0 : index
      %c0_9 = arith.constant 0 : index
      %20 = vector.load %arg13[%c0_8, %c0_9] : memref<8x8xf32, #tpu.memory_space<vmem>>, vector<8x8xf32>
      %21 = vector.broadcast %19 : vector<8x1xf32> to vector<8x8xf32>
      %22 = arith.mulf %20, %21 : vector<8x8xf32>
      %c0_10 = arith.constant 0 : index
      %c0_11 = arith.constant 0 : index
      %c0_12 = arith.constant 0 : index
      %23 = vector.load %arg10[%c0_10, %c0_11, %c0_12] : memref<1x8x8xf32, #tpu.memory_space<vmem>>, vector<1x8x8xf32>
      %24 = vector.shape_cast %23 : vector<1x8x8xf32> to vector<8x8xf32>
      %25 = vector.shape_cast %22 : vector<8x8xf32> to vector<1x8x8xf32>
      tpu.vector_store %arg10[%c0_10, %c0_11, %c0_12], %25 {strides = array<i32>} : memref<1x8x8xf32, #tpu.memory_space<vmem>>, vector<1x8x8xf32>,
    } else {
    }
    return
  }
  func.func @transform_0(%arg0: i32, %arg1: i32, %arg2: i32) -> (i32, i32, i32) {
    %c0_i32 = arith.constant 0 : i32
    %c0_i32_0 = arith.constant 0 : i32
    return %arg0, %arg1, %c0_i32 : i32, i32, i32
  }
  func.func @transform_1(%arg0: i32, %arg1: i32, %arg2: i32) -> (i32, i32, i32) {
    %c0_i32 = arith.constant 0 : i32
    %c0_i32_0 = arith.constant 0 : i32
    return %arg0, %arg2, %c0_i32 : i32, i32, i32
  }
  func.func @transform_2(%arg0: i32, %arg1: i32, %arg2: i32) -> (i32, i32, i32) {
    %c0_i32 = arith.constant 0 : i32
    %c0_i32_0 = arith.constant 0 : i32
    return %arg0, %arg2, %c0_i32 : i32, i32, i32
  }
  func.func @transform_3(%arg0: i32, %arg1: i32, %arg2: i32) -> (i32, i32) {
    %c0_i32 = arith.constant 0 : i32
    %c0_i32_0 = arith.constant 0 : i32
    return %arg1, %c0_i32 : i32, i32
  }
  func.func @transform_4(%arg0: i32, %arg1: i32, %arg2: i32) -> (i32, i32) {
    %c0_i32 = arith.constant 0 : i32
    %c0_i32_0 = arith.constant 0 : i32
    return %arg1, %c0_i32 : i32, i32
  }
  func.func @transform_5(%arg0: i32, %arg1: i32, %arg2: i32) -> (i32, i32) {
    %c0_i32 = arith.constant 0 : i32
    %c0_i32_0 = arith.constant 0 : i32
    return %arg2, %c0_i32 : i32, i32
  }
  func.func @transform_6(%arg0: i32, %arg1: i32, %arg2: i32) -> (i32, i32) {
    %c0_i32 = arith.constant 0 : i32
    %c0_i32_0 = arith.constant 0 : i32
    return %arg2, %c0_i32 : i32, i32
  }
  func.func @transform_7(%arg0: i32, %arg1: i32, %arg2: i32) -> (i32, i32, i32) {
    %c0_i32 = arith.constant 0 : i32
    %c0_i32_0 = arith.constant 0 : i32
    return %arg0, %arg1, %c0_i32 : i32, i32, i32
  }
}

module attributes {stable_mosaic.version = 11 : i64} {
  func.func @_linear_kernel(%arg0: i32, %arg1: i32, %arg2: i32, %arg3: memref<16x32xf32, #tpu.memory_space<vmem>>, %arg4: memref<32x32xf32, #tpu.memory_space<vmem>>, %arg5: memref<1x32xf32, #tpu.memory_space<vmem>>, %arg6: memref<16x32xf32, #tpu.memory_space<vmem>>, %arg7: memref<16x32xf32, #tpu.memory_space<vmem>>) attributes {dimension_semantics = [#tpu.dimension_semantics<parallel>, #tpu.dimension_semantics<parallel>, #tpu.dimension_semantics<arbitrary>], iteration_bounds = array<i64: 1, 1, 1>, scalar_prefetch = 0 : i64, scratch_operands = 1 : i64, tpu.core_type = #tpu.core_type<tc>, window_params = [{transform_indices = @transform_0, window_bounds = array<i64: 16, 32>}, {transform_indices = @transform_1, window_bounds = array<i64: 32, 32>}, {transform_indices = @transform_2, window_bounds = array<i64: 1, 32>}, {transform_indices = @transform_3, window_bounds = array<i64: 16, 32>}]} {
    %c0_i32 = arith.constant 0 : i32
    %0 = arith.cmpi eq, %arg2, %c0_i32 : i32
    %1 = arith.extui %0 : i1 to i32
    %c0_i32_0 = arith.constant 0 : i32
    %2 = arith.cmpi ne, %1, %c0_i32_0 : i32
    scf.if %2 {
      %cst_10 = arith.constant 0.000000e+00 : f32
      %12 = vector.broadcast %cst_10 : f32 to vector<16x32xf32>
      %c0_11 = arith.constant 0 : index
      %c0_12 = arith.constant 0 : index
      %13 = vector.load %arg7[%c0_11, %c0_12] : memref<16x32xf32, #tpu.memory_space<vmem>>, vector<16x32xf32>
      tpu.vector_store %arg7[%c0_11, %c0_12], %12 {strides = array<i32>} : memref<16x32xf32, #tpu.memory_space<vmem>>, vector<16x32xf32>,
    } else {
    }
    %c0 = arith.constant 0 : index
    %c0_1 = arith.constant 0 : index
    %3 = vector.load %arg7[%c0, %c0_1] : memref<16x32xf32, #tpu.memory_space<vmem>>, vector<16x32xf32>
    %c0_2 = arith.constant 0 : index
    %c0_3 = arith.constant 0 : index
    %4 = vector.load %arg3[%c0_2, %c0_3] : memref<16x32xf32, #tpu.memory_space<vmem>>, vector<16x32xf32>
    %c0_4 = arith.constant 0 : index
    %c0_5 = arith.constant 0 : index
    %5 = vector.load %arg4[%c0_4, %c0_5] : memref<32x32xf32, #tpu.memory_space<vmem>>, vector<32x32xf32>
    %cst = arith.constant dense<0.000000e+00> : vector<16x32xf32>
    %6 = tpu.matmul %4, %5, %cst {dimension_numbers = #tpu.dot_dimension_numbers<[1], [0], [0], [1], [0, 0, 1, 1], [], []>} : vector<16x32xf32>, vector<32x32xf32>, vector<16x32xf32> -> vector<16x32xf32>
    %7 = arith.addf %3, %6 : vector<16x32xf32>
    %c0_6 = arith.constant 0 : index
    %c0_7 = arith.constant 0 : index
    %8 = vector.load %arg7[%c0_6, %c0_7] : memref<16x32xf32, #tpu.memory_space<vmem>>, vector<16x32xf32>
    tpu.vector_store %arg7[%c0_6, %c0_7], %7 {strides = array<i32>} : memref<16x32xf32, #tpu.memory_space<vmem>>, vector<16x32xf32>,
    %c0_i32_8 = arith.constant 0 : i32
    %9 = arith.cmpi eq, %arg2, %c0_i32_8 : i32
    %10 = arith.extui %9 : i1 to i32
    %c0_i32_9 = arith.constant 0 : i32
    %11 = arith.cmpi ne, %10, %c0_i32_9 : i32
    scf.if %11 {
      %c0_10 = arith.constant 0 : index
      %c0_11 = arith.constant 0 : index
      %12 = vector.load %arg7[%c0_10, %c0_11] : memref<16x32xf32, #tpu.memory_space<vmem>>, vector<16x32xf32>
      %c0_12 = arith.constant 0 : index
      %c0_13 = arith.constant 0 : index
      %13 = vector.load %arg5[%c0_12, %c0_13] : memref<1x32xf32, #tpu.memory_space<vmem>>, vector<1x32xf32>
      %14 = vector.broadcast %13 : vector<1x32xf32> to vector<16x32xf32>
      %15 = arith.addf %12, %14 : vector<16x32xf32>
      %c0_14 = arith.constant 0 : index
      %c0_15 = arith.constant 0 : index
      %16 = vector.load %arg6[%c0_14, %c0_15] : memref<16x32xf32, #tpu.memory_space<vmem>>, vector<16x32xf32>
      tpu.vector_store %arg6[%c0_14, %c0_15], %15 {strides = array<i32>} : memref<16x32xf32, #tpu.memory_space<vmem>>, vector<16x32xf32>,
    } else {
    }
    return
  }
  func.func @transform_0(%arg0: i32, %arg1: i32, %arg2: i32) -> (i32, i32) {
    %c0_i32 = arith.constant 0 : i32
    return %arg0, %arg2 : i32, i32
  }
  func.func @transform_1(%arg0: i32, %arg1: i32, %arg2: i32) -> (i32, i32) {
    %c0_i32 = arith.constant 0 : i32
    return %arg2, %arg1 : i32, i32
  }
  func.func @transform_2(%arg0: i32, %arg1: i32, %arg2: i32) -> (i32, i32) {
    %c0_i32 = arith.constant 0 : i32
    %c0_i32_0 = arith.constant 0 : i32
    return %c0_i32, %arg1 : i32, i32
  }
  func.func @transform_3(%arg0: i32, %arg1: i32, %arg2: i32) -> (i32, i32) {
    %c0_i32 = arith.constant 0 : i32
    return %arg0, %arg1 : i32, i32
  }
}

</mosaic_0001>

<llo_original>
// kernel: causal_self_attention_rope.3
$region0: #{causal_self_attention_rope.3}
  #allocation0 [shape = 'u32[]', space=smem, size = 0x4, offset = 0x4, fixed_abs, tag = 'smem constant byte address 0x4 - core index']
  #allocation1 [shape = 'u32[72,128]{1,0:T(1,128)}', space=vmem, size = 0x9000, scoped, tag = 'internal scratch']
  #allocation2 [shape = 'f32[16,96]{1,0:T(8,128)}', space=vmem, size = 0x2000, scoped, tag = 'scratch operand']
  %s0 = inlined_call_operand.vmem [shape: f32[16,32], index: 0, kind: input, shape index: {}]
  %s1 = inlined_call_operand.vmem [shape: f32[32,96], index: 1, kind: input, shape index: {}]
  %s2 = inlined_call_operand.vmem [shape: f32[1,96], index: 2, kind: input, shape index: {}]
  %s3 = inlined_call_operand.vmem [shape: f32[16,96], index: 3, kind: output, shape index: {}]
  %s4 = sld [smem:[#allocation0]]
  $region30: #{causal_self_attention_rope.3} parent=0
    _
  %s6 = ssub.s32 1, %s4
  %s7 = scalar_select 0, %s6, %s4
  // Predicated region
  $region2: #{causal_self_attention_rope.3} parent=0 // pred_check
    _
  $region3: #{causal_self_attention_rope.3} parent=0 // pred_check_branch
    %9 = sbr.rel (0) target = $region5
  $region4: #{causal_self_attention_rope.3} parent=0 // pred_region
    _
  $region5: #{causal_self_attention_rope.3} parent=0 // pred_fallthru
    _
  // Predicated region
  $region6: #{causal_self_attention_rope.3} parent=0 // pred_check
    _
  $region7: #{causal_self_attention_rope.3} parent=0 // pred_check_branch
    %11 = sbr.rel (0) target = $region9
  $region8: #{causal_self_attention_rope.3} parent=0 // pred_region
    _
  $region9: #{causal_self_attention_rope.3} parent=0 // pred_fallthru
    _
  // Predicated region
  $region10: #{causal_self_attention_rope.3} parent=0 // pred_check
    _
  $region11: #{causal_self_attention_rope.3} parent=0 // pred_check_branch
    %13 = sbr.rel (0) target = $region13
  $region12: #{causal_self_attention_rope.3} parent=0 // pred_region
    _
  $region13: #{causal_self_attention_rope.3} parent=0 // pred_fallthru
    _
  %p14 = scmp.eq.s32.totalorder 0, 0
  // Predicated region
  $region14: #{causal_self_attention_rope.3} parent=0 // pred_check
    %p15 = pneg %p14
  $region15: #{causal_self_attention_rope.3} parent=0 // pred_check_branch
    %17 = sbr.rel (%p15) target = $region17
  $region16: #{causal_self_attention_rope.3} parent=0 // pred_region
    %vm18 = vcmask 785408
    %19 = vst.msk [vmem:[#allocation2] sm:$0xff] %vm18, 0.0
    %20 = vst.msk [vmem:[#allocation2 + $0x8] sm:$0xff] %vm18, 0.0
  $region17: #{causal_self_attention_rope.3} parent=0 // pred_fallthru
    _
  %v21 = vld [vmem:[#allocation2] sm:$0xff]
  %v22 = vld [vmem:[#allocation2 + $0x8] sm:$0xff]
  %v23 = vld [vmem:[%s0] sm:$0xff]
  %v24 = vld [vmem:[%s0 + $0x8] sm:$0xff]
  %v25 = vld [vmem:[%s1] sm:$0xff]
  %v26 = vld [vmem:[%s1 + $0x8] sm:$0xff]
  %v27 = vld [vmem:[%s1 + $0x10] sm:$0xff]
  %v28 = vld [vmem:[%s1 + $0x18] sm:$0xff]
  %vm29 = vcmask 261120
  %v31 = vsel %vm29, %v23, 0
  %v34 = vsel %vm29, %v24, 0
  %36 = vmatpush.msra.mxu0 0.0
  %37 = vmatpush.msra.mxu0 0.0
  %38 = vmatpush.msra.mxu0 0.0
  %39 = vmatpush.msra.mxu0 0.0
  %40 = vmatpush.msra.mxu0 0.0
  %41 = vmatpush.msra.mxu0 0.0
  %42 = vmatpush.msra.mxu0 0.0
  %43 = vmatpush.msra.mxu0 0.0
  %44 = vmatpush.msra.mxu0 0.0
  %45 = vmatpush.msra.mxu0 0.0
  %46 = vmatpush.msra.mxu0 0.0
  %47 = vmatpush.msra.mxu0 0.0
  %48 = vmatpush.msra.mxu0 %v28
  %49 = vmatpush.msra.mxu0 %v27
  %50 = vmatpush.msra.mxu0 %v26
  %51 = vmatpush.msra.mxu0 %v25
  %52 = vmatmul.f32.gmra.mxu0 %v31
  %v53 = vpop.f32.mrf.mxu0
  %v54 = vadd.f32 0.0, %v53
  %55 = vmatmul.f32.gmra.mxu0 %v34
  %v56 = vpop.f32.mrf.mxu0
  %v57 = vadd.f32 0.0, %v56
  %58 = vdwg.mxu0
  %v59 = vadd.f32 %v21, %v54
  %v60 = vadd.f32 %v22, %v57
  %vm61 = vcmask 785408
  %62 = vst.msk [vmem:[#allocation2] sm:$0xff] %vm61, %v59
  %63 = vst.msk [vmem:[#allocation2 + $0x8] sm:$0xff] %vm61, %v60
  // Predicated region
  $region18: #{causal_self_attention_rope.3} parent=0 // pred_check
    %p64 = pneg %p14
  $region19: #{causal_self_attention_rope.3} parent=0 // pred_check_branch
    %66 = sbr.rel (%p64) target = $region21
  $region20: #{causal_self_attention_rope.3} parent=0 // pred_region
    %v67 = vld [vmem:[#allocation2] sm:$0xff]
    %v68 = vld [vmem:[#allocation2 + $0x8] sm:$0xff]
    %v69 = vld [vmem:[%s2] sm:$0x1]
    %v71 = vperm.slane %v69, 0
    %v73 = vadd.f32 %v67, %v71
    %v74 = vadd.f32 %v68, %v71
    %75 = vst.msk [vmem:[%s3] sm:$0xff] %vm61, %v73
    %76 = vst.msk [vmem:[%s3 + $0x8] sm:$0xff] %vm61, %v74
  $region21: #{causal_self_attention_rope.3} parent=0 // pred_fallthru
    _
  // Predicated region
  $region22: #{causal_self_attention_rope.3} parent=0 // pred_check
    _
  $region23: #{causal_self_attention_rope.3} parent=0 // pred_check_branch
    %78 = sbr.rel (0) target = $region25
  $region24: #{causal_self_attention_rope.3} parent=0 // pred_region
    _
  $region25: #{causal_self_attention_rope.3} parent=0 // pred_fallthru
    _
  // Predicated region
  $region26: #{causal_self_attention_rope.3} parent=0 // pred_check
    _
  $region27: #{causal_self_attention_rope.3} parent=0 // pred_check_branch
    %80 = sbr.rel (0) target = $region29
  $region28: #{causal_self_attention_rope.3} parent=0 // pred_region
    _
  $region29: #{causal_self_attention_rope.3} parent=0 // pred_fallthru
    _

// kernel: causal_self_attention_rope.5
$region0: #{causal_self_attention_rope.5}
  #allocation0 [shape = 'u32[]', space=smem, size = 0x4, offset = 0x4, fixed_abs, tag = 'smem constant byte address 0x4 - core index']
  #allocation1 [shape = 'u32[72,128]{1,0:T(1,128)}', space=vmem, size = 0x9000, scoped, tag = 'internal scratch']
  #allocation2 [shape = 'f32[16,32]{1,0:T(8,128)}', space=vmem, size = 0x2000, scoped, tag = 'scratch operand']
  %s0 = inlined_call_operand.vmem [shape: f32[16,32], index: 0, kind: input, shape index: {}]
  %s1 = inlined_call_operand.vmem [shape: f32[32,32], index: 1, kind: input, shape index: {}]
  %s2 = inlined_call_operand.vmem [shape: f32[1,32], index: 2, kind: input, shape index: {}]
  %s3 = inlined_call_operand.hbm [shape: f32[16,32], index: 3, kind: output, shape index: {}]
  %s4 = sld [smem:[#allocation0]]
  $region30: #{causal_self_attention_rope.5} parent=0
    _
  %s6 = ssub.s32 1, %s4
  %s7 = scalar_select 0, %s6, %s4
  $region1: #{causal_self_attention_rope.5} parent=0
    #allocation3 [shape = 'u8[8192]{0}', space=vmem, size = 0x2000, scoped, tag = 'output window, operand 0, single buffered']
    #allocation4 [shape = 's32[1]{0}', space=sflag, size = 0x4, scoped, tag = 'scoped memory for causal_self_attention_rope.5']
    %8 = vsyncpa [#allocation4], 0
    // Predicated region
    $region2: #{causal_self_attention_rope.5} parent=1 // pred_check
      _
    $region3: #{causal_self_attention_rope.5} parent=1 // pred_check_branch
      %10 = sbr.rel (0) target = $region5
    $region4: #{causal_self_attention_rope.5} parent=1 // pred_region
      _
    $region5: #{causal_self_attention_rope.5} parent=1 // pred_fallthru
      _
    // Predicated region
    $region6: #{causal_self_attention_rope.5} parent=1 // pred_check
      _
    $region7: #{causal_self_attention_rope.5} parent=1 // pred_check_branch
      %12 = sbr.rel (0) target = $region9
    $region8: #{causal_self_attention_rope.5} parent=1 // pred_region
      _
    $region9: #{causal_self_attention_rope.5} parent=1 // pred_fallthru
      _
    // Predicated region
    $region10: #{causal_self_attention_rope.5} parent=1 // pred_check
      _
    $region11: #{causal_self_attention_rope.5} parent=1 // pred_check_branch
      %14 = sbr.rel (0) target = $region13
    $region12: #{causal_self_attention_rope.5} parent=1 // pred_region
      _
    $region13: #{causal_self_attention_rope.5} parent=1 // pred_fallthru
      _
    %p15 = scmp.eq.s32.totalorder 0, 0
    // Predicated region
    $region14: #{causal_self_attention_rope.5} parent=1 // pred_check
      %p16 = pneg %p15
    $region15: #{causal_self_attention_rope.5} parent=1 // pred_check_branch
      %18 = sbr.rel (%p16) target = $region17
    $region16: #{causal_self_attention_rope.5} parent=1 // pred_region
      %vm19 = vcmask 261120
      %20 = vst.msk [vmem:[#allocation2] sm:$0xff] %vm19, 0.0
      %21 = vst.msk [vmem:[#allocation2 + $0x8] sm:$0xff] %vm19, 0.0
    $region17: #{causal_self_attention_rope.5} parent=1 // pred_fallthru
      _
    %v22 = vld [vmem:[#allocation2] sm:$0xff]
    %v23 = vld [vmem:[#allocation2 + $0x8] sm:$0xff]
    %v24 = vld [vmem:[%s0] sm:$0xff]
    %v25 = vld [vmem:[%s0 + $0x8] sm:$0xff]
    %v26 = vld [vmem:[%s1] sm:$0xff]
    %v27 = vld [vmem:[%s1 + $0x8] sm:$0xff]
    %v28 = vld [vmem:[%s1 + $0x10] sm:$0xff]
    %v29 = vld [vmem:[%s1 + $0x18] sm:$0xff]
    %vm30 = vcmask 261120
    %v32 = vsel %vm30, %v24, 0
    %v35 = vsel %vm30, %v25, 0
    %37 = vmatpush.msra.mxu0 0.0
    %38 = vmatpush.msra.mxu0 0.0
    %39 = vmatpush.msra.mxu0 0.0
    %40 = vmatpush.msra.mxu0 0.0
    %41 = vmatpush.msra.mxu0 0.0
    %42 = vmatpush.msra.mxu0 0.0
    %43 = vmatpush.msra.mxu0 0.0
    %44 = vmatpush.msra.mxu0 0.0
    %45 = vmatpush.msra.mxu0 0.0
    %46 = vmatpush.msra.mxu0 0.0
    %47 = vmatpush.msra.mxu0 0.0
    %48 = vmatpush.msra.mxu0 0.0
    %49 = vmatpush.msra.mxu0 %v29
    %50 = vmatpush.msra.mxu0 %v28
    %51 = vmatpush.msra.mxu0 %v27
    %52 = vmatpush.msra.mxu0 %v26
    %53 = vmatmul.f32.gmra.mxu0 %v32
    %v54 = vpop.f32.mrf.mxu0
    %v55 = vadd.f32 0.0, %v54
    %56 = vmatmul.f32.gmra.mxu0 %v35
    %v57 = vpop.f32.mrf.mxu0
    %v58 = vadd.f32 0.0, %v57
    %59 = vdwg.mxu0
    %v60 = vadd.f32 %v22, %v55
    %v61 = vadd.f32 %v23, %v58
    %62 = vst.msk [vmem:[#allocation2] sm:$0xff] %vm30, %v60
    %63 = vst.msk [vmem:[#allocation2 + $0x8] sm:$0xff] %vm30, %v61
    // Predicated region
    $region18: #{causal_self_attention_rope.5} parent=1 // pred_check
      %p64 = pneg %p15
    $region19: #{causal_self_attention_rope.5} parent=1 // pred_check_branch
      %66 = sbr.rel (%p64) target = $region21
    $region20: #{causal_self_attention_rope.5} parent=1 // pred_region
      %v67 = vld [vmem:[#allocation2] sm:$0xff]
      %v68 = vld [vmem:[#allocation2 + $0x8] sm:$0xff]
      %v69 = vld [vmem:[%s2] sm:$0x1]
      %v71 = vperm.slane %v69, 0
      %v73 = vadd.f32 %v67, %v71
      %v74 = vadd.f32 %v68, %v71
      %75 = vst.msk [vmem:[#allocation3] sm:$0xff] %vm30, %v73
      %76 = vst.msk [vmem:[#allocation3 + $0x8] sm:$0xff] %vm30, %v74
    $region21: #{causal_self_attention_rope.5} parent=1 // pred_fallthru
      _
    // Predicated region
    $region22: #{causal_self_attention_rope.5} parent=1 // pred_check
      _
    $region23: #{causal_self_attention_rope.5} parent=1 // pred_check_branch
      %78 = sbr.rel (0) target = $region25
    $region24: #{causal_self_attention_rope.5} parent=1 // pred_region
      %80 = vsyncadd [#allocation4], 0
      %s81 = sshll.u32 [#allocation3], 4
      %s82 = int_to_ptr.vmem [resolvable:$true] %s81
      %s83 = sshll.u32 %s3, 4
      %s84 = int_to_ptr.hbm [resolvable:$true] %s83
      %89 = dma.vmem_to_hbm [thread:$0]  %s82, 256, %s84, [#allocation4], 128, 128, 8
    $region25: #{causal_self_attention_rope.5} parent=1 // pred_fallthru
      _
    // Predicated region
    $region26: #{causal_self_attention_rope.5} parent=1 // pred_check
      _
    $region27: #{causal_self_attention_rope.5} parent=1 // pred_check_branch
      %91 = sbr.rel (0) target = $region29
    $region28: #{causal_self_attention_rope.5} parent=1 // pred_region
      %93 = dma.done [#allocation4], 256
    $region29: #{causal_self_attention_rope.5} parent=1 // pred_fallthru
      _
    %94 = vsyncpa [#allocation4], 1

// kernel: causal_self_attention_rope.4
$region0: #{causal_self_attention_rope.4}
  #allocation0 [shape = 'u32[]', space=smem, size = 0x4, offset = 0x4, fixed_abs, tag = 'smem constant byte address 0x4 - core index']
  #allocation1 [shape = 'u32[72,128]{1,0:T(1,128)}', space=vmem, size = 0x9000, scoped, tag = 'internal scratch']
  #allocation2 [shape = 'f32[8,1]{1,0:T(8,128)}', space=vmem, size = 0x1000, scoped, tag = 'scratch operand']
  #allocation3 [shape = 'f32[8,1]{1,0:T(8,128)}', space=vmem, size = 0x1000, scoped, tag = 'scratch operand']
  #allocation4 [shape = 'f32[8,8]{1,0:T(8,128)}', space=vmem, size = 0x1000, scoped, tag = 'scratch operand']
  #allocation5 [shape = 'f32[8,8]{1,0:T(8,128)}', space=vmem, size = 0x1000, scoped, tag = 'scratch operand']
  %s0 = inlined_call_operand.vmem [shape: f32[8,8,8], index: 0, kind: input, shape index: {}]
  %s1 = inlined_call_operand.vmem [shape: f32[8,8,8], index: 1, kind: input, shape index: {}]
  %s2 = inlined_call_operand.vmem [shape: f32[8,8,8], index: 2, kind: input, shape index: {}]
  %s3 = inlined_call_operand.vmem [shape: f32[8,4], index: 3, kind: input, shape index: {}, may-alias: {3,5}]
  %s4 = inlined_call_operand.vmem [shape: f32[8,4], index: 4, kind: input, shape index: {}, may-alias: {4,6}]
  %s5 = inlined_call_operand.vmem [shape: f32[8,4], index: 5, kind: input, shape index: {}, may-alias: {3,5}]
  %s6 = inlined_call_operand.vmem [shape: f32[8,4], index: 6, kind: input, shape index: {}, may-alias: {4,6}]
  %s7 = inlined_call_operand.vmem [shape: f32[8,8,8], index: 7, kind: output, shape index: {}]
  %s8 = sld [smem:[#allocation0]]
  $region77: #{causal_self_attention_rope.4} parent=0
    _
  %s10 = ssub.s32 1, %s8
  %s11 = scalar_select 0, %s10, %s8
  loop: start=0, step=1, limit=10
  $region2: #{causal_self_attention_rope.4} parent=0 // loop_pre_header
    _
  $region3: #{causal_self_attention_rope.4} parent=0 // loop_header
    %s13 = sphi 0, %s17
    %p14 = scmp.ge.s32.totalorder %s13, 10
    %s20 = sphi 0, %s39
    %s21 = sphi 0, %s35
    %s22 = sphi 0, %s31
    %s23 = sphi 0, %s20
    %s24 = sphi 0, %s21
    %s25 = sphi 0, %s22
    %s26 = sphi 0, %s23
    %s27 = sphi 0, %s24
    %s28 = sphi 0, %s25
    %s44 = sphi 0, %s46
    %s47 = sphi 0, %s44
    %s48 = sphi 0, %s47
    %s64 = sphi 0, %s48
    %s72 = sphi 0, %s74
    %s75 = sphi 0, %s72
    %s76 = sphi 0, %s75
    %s92 = sphi 0, %s76
    %s100 = sphi 0, %s102
    %s103 = sphi 0, %s100
    %s104 = sphi 0, %s103
    %s120 = sphi 0, %s104
    %s126 = sphi 0, %s128
    %s129 = sphi 0, %s126
    %s130 = sphi 0, %s129
    %s146 = sphi 0, %s130
    %s152 = sphi 0, %s154
    %s155 = sphi 0, %s152
    %s156 = sphi 0, %s155
    %s172 = sphi 0, %s156
    %s178 = sphi 0, %s180
    %s181 = sphi 0, %s178
    %s182 = sphi 0, %s181
    %s198 = sphi 0, %s182
    %s204 = sphi 0, %s206
    %s207 = sphi 0, %s204
    %s208 = sphi 0, %s207
    %s224 = sphi 0, %s208
    %s232 = sphi 0, %s234
    %s235 = sphi 0, %s232
    %s236 = sphi 0, %s235
    %s252 = sphi 0, %s236
  $region4: #{causal_self_attention_rope.4} parent=0 // loop_header_branch
    %16 = sbr.rel (%p14) target = $region8
  $region5: #{causal_self_attention_rope.4} parent=0 // loop_body
    %s18 = ssub.s32 %s13, 1
    %s19 = ssub.s32 %s13, 2
    %s29 = sadd.s32 1, %s22
    %p30 = scmp.ge.s32.totalorder %s29, 1
    %s31 = scalar_select %p30, 0, %s29
    %s32 = sadd.s32 1, %s21
    %s33 = scalar_select %p30, %s32, %s21
    %p34 = scmp.ge.s32.totalorder %s33, 1
    %s35 = scalar_select %p34, 0, %s33
    %s36 = sadd.s32 1, %s20
    %s37 = scalar_select %p34, %s36, %s20
    %p38 = scmp.ge.s32.totalorder %s37, 8
    %s39 = scalar_select %p38, 0, %s37
    %s40 = ssub.s32 %s20, %s39
    %s41 = ssub.s32 %s21, %s35
    %s42 = sor.u32 %s40, %s41
    %p43 = scmp.eq.s32.totalorder %s42, 0
    %s45 = sadd.s32 %s44, 1
    %s46 = scalar_select %p43, %s44, %s45
    %p49 = pneg %p43
    %p50 = scmp.eq.s32.totalorder %s13, 7
    %p51 = por %p49, %p50
    %p52 = scmp.ne.s32.totalorder %s44, %s47
    %p53 = scmp.eq.s32.totalorder %s13, 0
    %p54 = por %p52, %p53
    %p55 = scmp.ne.s32.totalorder %s44, %s47
    %p56 = scmp.eq.s32.totalorder %s18, 7
    %p57 = por %p55, %p56
    %p58 = scmp.ne.s32.totalorder %s47, %s48
    %p59 = scmp.eq.s32.totalorder %s18, 0
    %p60 = por %p58, %p59
    %p61 = scmp.ne.s32.totalorder %s47, %s48
    %p62 = scmp.eq.s32.totalorder %s19, 7
    %p63 = por %p61, %p62
    %p65 = scmp.ne.s32.totalorder %s48, %s64
    %p66 = scmp.eq.s32.totalorder %s19, 0
    %p67 = por %p65, %p66
    %s68 = ssub.s32 %s20, %s39
    %s69 = ssub.s32 %s22, %s31
    %s70 = sor.u32 %s68, %s69
    %p71 = scmp.eq.s32.totalorder %s70, 0
    %s73 = sadd.s32 %s72, 1
    %s74 = scalar_select %p71, %s72, %s73
    %p77 = pneg %p71
    %p78 = scmp.eq.s32.totalorder %s13, 7
    %p79 = por %p77, %p78
    %p80 = scmp.ne.s32.totalorder %s72, %s75
    %p81 = scmp.eq.s32.totalorder %s13, 0
    %p82 = por %p80, %p81
    %p83 = scmp.ne.s32.totalorder %s72, %s75
    %p84 = scmp.eq.s32.totalorder %s18, 7
    %p85 = por %p83, %p84
    %p86 = scmp.ne.s32.totalorder %s75, %s76
    %p87 = scmp.eq.s32.totalorder %s18, 0
    %p88 = por %p86, %p87
    %p89 = scmp.ne.s32.totalorder %s75, %s76
    %p90 = scmp.eq.s32.totalorder %s19, 7
    %p91 = por %p89, %p90
    %p93 = scmp.ne.s32.totalorder %s76, %s92
    %p94 = scmp.eq.s32.totalorder %s19, 0
    %p95 = por %p93, %p94
    %s96 = ssub.s32 %s20, %s39
    %s97 = ssub.s32 %s22, %s31
    %s98 = sor.u32 %s96, %s97
    %p99 = scmp.eq.s32.totalorder %s98, 0
    %s101 = sadd.s32 %s100, 1
    %s102 = scalar_select %p99, %s100, %s101
    %p105 = pneg %p99
    %p106 = scmp.eq.s32.totalorder %s13, 7
    %p107 = por %p105, %p106
    %p108 = scmp.ne.s32.totalorder %s100, %s103
    %p109 = scmp.eq.s32.totalorder %s13, 0
    %p110 = por %p108, %p109
    %p111 = scmp.ne.s32.totalorder %s100, %s103
    %p112 = scmp.eq.s32.totalorder %s18, 7
    %p113 = por %p111, %p112
    %p114 = scmp.ne.s32.totalorder %s103, %s104
    %p115 = scmp.eq.s32.totalorder %s18, 0
    %p116 = por %p114, %p115
    %p117 = scmp.ne.s32.totalorder %s103, %s104
    %p118 = scmp.eq.s32.totalorder %s19, 7
    %p119 = por %p117, %p118
    %p121 = scmp.ne.s32.totalorder %s104, %s120
    %p122 = scmp.eq.s32.totalorder %s19, 0
    %p123 = por %p121, %p122
    %s124 = ssub.s32 %s21, %s35
    %p125 = scmp.eq.s32.totalorder %s124, 0
    %s127 = sadd.s32 %s126, 1
    %s128 = scalar_select %p125, %s126, %s127
    %p131 = pneg %p125
    %p132 = scmp.eq.s32.totalorder %s13, 7
    %p133 = por %p131, %p132
    %p134 = scmp.ne.s32.totalorder %s126, %s129
    %p135 = scmp.eq.s32.totalorder %s13, 0
    %p136 = por %p134, %p135
    %p137 = scmp.ne.s32.totalorder %s126, %s129
    %p138 = scmp.eq.s32.totalorder %s18, 7
    %p139 = por %p137, %p138
    %p140 = scmp.ne.s32.totalorder %s129, %s130
    %p141 = scmp.eq.s32.totalorder %s18, 0
    %p142 = por %p140, %p141
    %p143 = scmp.ne.s32.totalorder %s129, %s130
    %p144 = scmp.eq.s32.totalorder %s19, 7
    %p145 = por %p143, %p144
    %p147 = scmp.ne.s32.totalorder %s130, %s146
    %p148 = scmp.eq.s32.totalorder %s19, 0
    %p149 = por %p147, %p148
    %s150 = ssub.s32 %s21, %s35
    %p151 = scmp.eq.s32.totalorder %s150, 0
    %s153 = sadd.s32 %s152, 1
    %s154 = scalar_select %p151, %s152, %s153
    %p157 = pneg %p151
    %p158 = scmp.eq.s32.totalorder %s13, 7
    %p159 = por %p157, %p158
    %p160 = scmp.ne.s32.totalorder %s152, %s155
    %p161 = scmp.eq.s32.totalorder %s13, 0
    %p162 = por %p160, %p161
    %p163 = scmp.ne.s32.totalorder %s152, %s155
    %p164 = scmp.eq.s32.totalorder %s18, 7
    %p165 = por %p163, %p164
    %p166 = scmp.ne.s32.totalorder %s155, %s156
    %p167 = scmp.eq.s32.totalorder %s18, 0
    %p168 = por %p166, %p167
    %p169 = scmp.ne.s32.totalorder %s155, %s156
    %p170 = scmp.eq.s32.totalorder %s19, 7
    %p171 = por %p169, %p170
    %p173 = scmp.ne.s32.totalorder %s156, %s172
    %p174 = scmp.eq.s32.totalorder %s19, 0
    %p175 = por %p173, %p174
    %s176 = ssub.s32 %s22, %s31
    %p177 = scmp.eq.s32.totalorder %s176, 0
    %s179 = sadd.s32 %s178, 1
    %s180 = scalar_select %p177, %s178, %s179
    %p183 = pneg %p177
    %p184 = scmp.eq.s32.totalorder %s13, 7
    %p185 = por %p183, %p184
    %p186 = scmp.ne.s32.totalorder %s178, %s181
    %p187 = scmp.eq.s32.totalorder %s13, 0
    %p188 = por %p186, %p187
    %p189 = scmp.ne.s32.totalorder %s178, %s181
    %p190 = scmp.eq.s32.totalorder %s18, 7
    %p191 = por %p189, %p190
    %p192 = scmp.ne.s32.totalorder %s181, %s182
    %p193 = scmp.eq.s32.totalorder %s18, 0
    %p194 = por %p192, %p193
    %p195 = scmp.ne.s32.totalorder %s181, %s182
    %p196 = scmp.eq.s32.totalorder %s19, 7
    %p197 = por %p195, %p196
    %p199 = scmp.ne.s32.totalorder %s182, %s198
    %p200 = scmp.eq.s32.totalorder %s19, 0
    %p201 = por %p199, %p200
    %s202 = ssub.s32 %s22, %s31
    %p203 = scmp.eq.s32.totalorder %s202, 0
    %s205 = sadd.s32 %s204, 1
    %s206 = scalar_select %p203, %s204, %s205
    %p209 = pneg %p203
    %p210 = scmp.eq.s32.totalorder %s13, 7
    %p211 = por %p209, %p210
    %p212 = scmp.ne.s32.totalorder %s204, %s207
    %p213 = scmp.eq.s32.totalorder %s13, 0
    %p214 = por %p212, %p213
    %p215 = scmp.ne.s32.totalorder %s204, %s207
    %p216 = scmp.eq.s32.totalorder %s18, 7
    %p217 = por %p215, %p216
    %p218 = scmp.ne.s32.totalorder %s207, %s208
    %p219 = scmp.eq.s32.totalorder %s18, 0
    %p220 = por %p218, %p219
    %p221 = scmp.ne.s32.totalorder %s207, %s208
    %p222 = scmp.eq.s32.totalorder %s19, 7
    %p223 = por %p221, %p222
    %p225 = scmp.ne.s32.totalorder %s208, %s224
    %p226 = scmp.eq.s32.totalorder %s19, 0
    %p227 = por %p225, %p226
    %s228 = ssub.s32 %s20, %s39
    %s229 = ssub.s32 %s21, %s35
    %s230 = sor.u32 %s228, %s229
    %p231 = scmp.eq.s32.totalorder %s230, 0
    %s233 = sadd.s32 %s232, 1
    %s234 = scalar_select %p231, %s232, %s233
    %p237 = pneg %p231
    %p238 = scmp.eq.s32.totalorder %s13, 7
    %p239 = por %p237, %p238
    %p240 = scmp.ne.s32.totalorder %s232, %s235
    %p241 = scmp.eq.s32.totalorder %s13, 0
    %p242 = por %p240, %p241
    %p243 = scmp.ne.s32.totalorder %s232, %s235
    %p244 = scmp.eq.s32.totalorder %s18, 7
    %p245 = por %p243, %p244
    %p246 = scmp.ne.s32.totalorder %s235, %s236
    %p247 = scmp.eq.s32.totalorder %s18, 0
    %p248 = por %p246, %p247
    %p249 = scmp.ne.s32.totalorder %s235, %s236
    %p250 = scmp.eq.s32.totalorder %s19, 7
    %p251 = por %p249, %p250
    %p253 = scmp.ne.s32.totalorder %s236, %s252
    %p254 = scmp.eq.s32.totalorder %s19, 0
    %p255 = por %p253, %p254
    %p256 = scmp.le.s32.totalorder 1, %s13
    %p257 = scmp.lt.s32.totalorder %s13, 9
    %p258 = pnand %p256, %p257
    %p259 = pneg %p258
    // Predicated region
    $region9: #{causal_self_attention_rope.4} parent=5 // pred_check
      _
    $region10: #{causal_self_attention_rope.4} parent=5 // pred_check_branch
      %261 = sbr.rel (%p258) target = $region12
    $region11: #{causal_self_attention_rope.4} parent=5 // pred_region
      %s262 = ssub.s32 %s13, 1
      // Predicated region
      $region13: #{causal_self_attention_rope.4} parent=11 // pred_check
        %p263 = pneg %p142
      $region14: #{causal_self_attention_rope.4} parent=11 // pred_check_branch
        %265 = sbr.rel (%p263) target = $region16
      $region15: #{causal_self_attention_rope.4} parent=11 // pred_region
        %p266 = scmp.lt.s32.totalorder %s24, 0
        %s267 = scalar_select %p266, %s24, 0
        %s268 = smul.addr %s267, 8
        %s269 = scalar_lea.vmem %s3, %s268
      $region16: #{causal_self_attention_rope.4} parent=11 // pred_fallthru
        _
      // Predicated region
      $region17: #{causal_self_attention_rope.4} parent=11 // pred_check
        %p270 = pneg %p168
      $region18: #{causal_self_attention_rope.4} parent=11 // pred_check_branch
        %272 = sbr.rel (%p270) target = $region20
      $region19: #{causal_self_attention_rope.4} parent=11 // pred_region
        %p273 = scmp.lt.s32.totalorder %s24, 0
        %s274 = scalar_select %p273, %s24, 0
        %s275 = smul.addr %s274, 8
        %s276 = scalar_lea.vmem %s4, %s275
      $region20: #{causal_self_attention_rope.4} parent=11 // pred_fallthru
        _
      // Predicated region
      $region21: #{causal_self_attention_rope.4} parent=11 // pred_check
        %p277 = pneg %p194
      $region22: #{causal_self_attention_rope.4} parent=11 // pred_check_branch
        %279 = sbr.rel (%p277) target = $region24
      $region23: #{causal_self_attention_rope.4} parent=11 // pred_region
        %p280 = scmp.lt.s32.totalorder %s25, 0
        %s281 = scalar_select %p280, %s25, 0
        %s282 = smul.addr %s281, 8
        %s283 = scalar_lea.vmem %s5, %s282
      $region24: #{causal_self_attention_rope.4} parent=11 // pred_fallthru
        _
      // Predicated region
      $region25: #{causal_self_attention_rope.4} parent=11 // pred_check
        %p284 = pneg %p220
      $region26: #{causal_self_attention_rope.4} parent=11 // pred_check_branch
        %286 = sbr.rel (%p284) target = $region28
      $region27: #{causal_self_attention_rope.4} parent=11 // pred_region
        %p287 = scmp.lt.s32.totalorder %s25, 0
        %s288 = scalar_select %p287, %s25, 0
        %s289 = smul.addr %s288, 8
        %s290 = scalar_lea.vmem %s6, %s289
      $region28: #{causal_self_attention_rope.4} parent=11 // pred_fallthru
        _
    $region12: #{causal_self_attention_rope.4} parent=5 // pred_fallthru
      _
    %p291 = scmp.lt.s32.totalorder %s13, 8
    // Predicated region
    $region29: #{causal_self_attention_rope.4} parent=5 // pred_check
      %p292 = pneg %p291
    $region30: #{causal_self_attention_rope.4} parent=5 // pred_check_branch
      %294 = sbr.rel (%p292) target = $region32
    $region31: #{causal_self_attention_rope.4} parent=5 // pred_region
      // Predicated region
      $region33: #{causal_self_attention_rope.4} parent=31 // pred_check
        %p295 = pneg %p54
      $region34: #{causal_self_attention_rope.4} parent=31 // pred_check_branch
        %297 = sbr.rel (%p295) target = $region36
      $region35: #{causal_self_attention_rope.4} parent=31 // pred_region
        %p298 = scmp.lt.s32.totalorder %s20, 7
        %s299 = scalar_select %p298, %s20, 7
        %p300 = scmp.lt.s32.totalorder %s21, 0
        %s301 = scalar_select %p300, %s21, 0
        %s302 = sadd.s32 %s301, %s299
        %s303 = smul.addr %s302, 8
        %s304 = scalar_lea.vmem %s0, %s303
      $region36: #{causal_self_attention_rope.4} parent=31 // pred_fallthru
        _
      // Predicated region
      $region37: #{causal_self_attention_rope.4} parent=31 // pred_check
        %p305 = pneg %p82
      $region38: #{causal_self_attention_rope.4} parent=31 // pred_check_branch
        %307 = sbr.rel (%p305) target = $region40
      $region39: #{causal_self_attention_rope.4} parent=31 // pred_region
        %p308 = scmp.lt.s32.totalorder %s20, 7
        %s309 = scalar_select %p308, %s20, 7
        %p310 = scmp.lt.s32.totalorder %s22, 0
        %s311 = scalar_select %p310, %s22, 0
        %s312 = sadd.s32 %s311, %s309
        %s313 = smul.addr %s312, 8
        %s314 = scalar_lea.vmem %s1, %s313
      $region40: #{causal_self_attention_rope.4} parent=31 // pred_fallthru
        _
      // Predicated region
      $region41: #{causal_self_attention_rope.4} parent=31 // pred_check
        %p315 = pneg %p110
      $region42: #{causal_self_attention_rope.4} parent=31 // pred_check_branch
        %317 = sbr.rel (%p315) target = $region44
      $region43: #{causal_self_attention_rope.4} parent=31 // pred_region
        %p318 = scmp.lt.s32.totalorder %s20, 7
        %s319 = scalar_select %p318, %s20, 7
        %p320 = scmp.lt.s32.totalorder %s22, 0
        %s321 = scalar_select %p320, %s22, 0
        %s322 = sadd.s32 %s321, %s319
        %s323 = smul.addr %s322, 8
        %s324 = scalar_lea.vmem %s2, %s323
      $region44: #{causal_self_attention_rope.4} parent=31 // pred_fallthru
        _
    $region32: #{causal_self_attention_rope.4} parent=5 // pred_fallthru
      _
    %p325 = scmp.le.s32.totalorder 1, %s13
    %p326 = scmp.lt.s32.totalorder %s13, 9
    %p327 = pnand %p325, %p326
    %p328 = pneg %p327
    // Predicated region
    $region45: #{causal_self_attention_rope.4} parent=5 // pred_check
      _
    $region46: #{causal_self_attention_rope.4} parent=5 // pred_check_branch
      %330 = sbr.rel (%p327) target = $region48
    $region47: #{causal_self_attention_rope.4} parent=5 // pred_region
      %s331 = ssub.s32 %s13, 1
      %p332 = scmp.lt.s32.totalorder %s23, 7
      %s333 = scalar_select %p332, %s23, 7
      %p334 = scmp.lt.s32.totalorder %s24, 0
      %s335 = scalar_select %p334, %s24, 0
      %s336 = sadd.s32 %s335, %s333
      %s337 = smul.addr %s336, 8
      %s338 = scalar_lea.vmem %s0, %s337
      %p339 = pneg %p60
      %p340 = pneg %p57
      %p341 = scmp.lt.s32.totalorder %s23, 7
      %s342 = scalar_select %p341, %s23, 7
      %p343 = scmp.lt.s32.totalorder %s25, 0
      %s344 = scalar_select %p343, %s25, 0
      %s345 = sadd.s32 %s344, %s342
      %s346 = smul.addr %s345, 8
      %s347 = scalar_lea.vmem %s1, %s346
      %p348 = pneg %p88
      %p349 = pneg %p85
      %p350 = scmp.lt.s32.totalorder %s23, 7
      %s351 = scalar_select %p350, %s23, 7
      %p352 = scmp.lt.s32.totalorder %s25, 0
      %s353 = scalar_select %p352, %s25, 0
      %s354 = sadd.s32 %s353, %s351
      %s355 = smul.addr %s354, 8
      %s356 = scalar_lea.vmem %s2, %s355
      %p357 = pneg %p116
      %p358 = pneg %p113
      %p359 = scmp.lt.s32.totalorder %s24, 0
      %s360 = scalar_select %p359, %s24, 0
      %s361 = smul.addr %s360, 8
      %s362 = scalar_lea.vmem %s3, %s361
      %p363 = pneg %p142
      %p364 = pneg %p139
      %p365 = scmp.lt.s32.totalorder %s24, 0
      %s366 = scalar_select %p365, %s24, 0
      %s367 = smul.addr %s366, 8
      %s368 = scalar_lea.vmem %s4, %s367
      %p369 = pneg %p168
      %p370 = pneg %p165
      %p371 = scmp.lt.s32.totalorder %s25, 0
      %s372 = scalar_select %p371, %s25, 0
      %s373 = smul.addr %s372, 8
      %s374 = scalar_lea.vmem %s5, %s373
      %p375 = pneg %p194
      %p376 = pneg %p191
      %p377 = scmp.lt.s32.totalorder %s25, 0
      %s378 = scalar_select %p377, %s25, 0
      %s379 = smul.addr %s378, 8
      %s380 = scalar_lea.vmem %s6, %s379
      %p381 = pneg %p220
      %p382 = pneg %p217
      %p383 = pneg %p248
      %p384 = pneg %p245
      %p385 = scmp.lt.s32.totalorder %s23, 7
      %s386 = scalar_select %p385, %s23, 7
      %p387 = scmp.lt.s32.totalorder %s24, 0
      %s388 = scalar_select %p387, %s24, 0
      %s389 = sadd.s32 %s388, %s386
      %s390 = smul.addr %s389, 8
      %s391 = scalar_lea.vmem %s7, %s390
      %p392 = scmp.lt.s32.totalorder %s23, 7
      %s393 = scalar_select %p392, %s23, 7
      %p394 = scmp.lt.s32.totalorder %s24, 0
      %s395 = scalar_select %p394, %s24, 0
      %s396 = sadd.s32 %s395, %s393
      %s397 = smul.addr %s396, 8
      %s398 = scalar_lea.vmem %s0, %s397
      %p399 = scmp.lt.s32.totalorder %s23, 7
      %s400 = scalar_select %p399, %s23, 7
      %p401 = scmp.lt.s32.totalorder %s25, 0
      %s402 = scalar_select %p401, %s25, 0
      %s403 = sadd.s32 %s402, %s400
      %s404 = smul.addr %s403, 8
      %s405 = scalar_lea.vmem %s1, %s404
      %p406 = scmp.lt.s32.totalorder %s23, 7
      %s407 = scalar_select %p406, %s23, 7
      %p408 = scmp.lt.s32.totalorder %s25, 0
      %s409 = scalar_select %p408, %s25, 0
      %s410 = sadd.s32 %s409, %s407
      %s411 = smul.addr %s410, 8
      %s412 = scalar_lea.vmem %s2, %s411
      %p413 = scmp.lt.s32.totalorder %s24, 0
      %s414 = scalar_select %p413, %s24, 0
      %s415 = smul.addr %s414, 8
      %s416 = scalar_lea.vmem %s3, %s415
      %p417 = scmp.lt.s32.totalorder %s24, 0
      %s418 = scalar_select %p417, %s24, 0
      %s419 = smul.addr %s418, 8
      %s420 = scalar_lea.vmem %s4, %s419
      %p421 = scmp.lt.s32.totalorder %s25, 0
      %s422 = scalar_select %p421, %s25, 0
      %s423 = smul.addr %s422, 8
      %s424 = scalar_lea.vmem %s5, %s423
      %p425 = scmp.lt.s32.totalorder %s25, 0
      %s426 = scalar_select %p425, %s25, 0
      %s427 = smul.addr %s426, 8
      %s428 = scalar_lea.vmem %s6, %s427
      %p429 = scmp.lt.s32.totalorder %s23, 7
      %s430 = scalar_select %p429, %s23, 7
      %p431 = scmp.lt.s32.totalorder %s24, 0
      %s432 = scalar_select %p431, %s24, 0
      %s433 = sadd.s32 %s432, %s430
      %s434 = smul.addr %s433, 8
      %s435 = scalar_lea.vmem %s7, %s434
      %s436 = smul.u32 %s24, 8
      %s437 = sadd.s32 %s436, 7
      %s438 = smul.u32 %s25, 8
      %s439 = sadd.s32 %s438, 7
      %p440 = scmp.eq.s32.totalorder %s25, 0
      // Predicated region
      $region49: #{causal_self_attention_rope.4} parent=47 // pred_check
        %p441 = pneg %p440
      $region50: #{causal_self_attention_rope.4} parent=47 // pred_check_branch
        %443 = sbr.rel (%p441) target = $region52
      $region51: #{causal_self_attention_rope.4} parent=47 // pred_region
        %vm444 = vcmask 7168
        %445 = vst.msk [vmem:[#allocation2] sm:$0xff] %vm444, -1e+30
        %446 = vst.msk [vmem:[#allocation3] sm:$0xff] %vm444, 0.0
        %vm447 = vcmask 64512
        %448 = vst.msk [vmem:[#allocation4] sm:$0xff] %vm447, 0.0
        %v449 = vld [vmem:[%s398] sm:$0xff]
        %v450 = vld [vmem:[%s420] sm:$0xff]
        %v451 = vld [vmem:[%s416] sm:$0xff]
        %v452 = vmul.f32 %v449, %v450
        %454 = vrot.lane.b32.xlu0 %v451, 4
        %v455 = vpop.permute.xlu0 %454
        %v457 = vmul.f32 %v449, %v455
        %459 = vrot.lane.b32.xlu0 %v457, 124
        %v460 = vpop.permute.xlu0 %459
        %v462 = vsub.f32 %v452, %v460
        %v463 = vmul.f32 %v449, %v451
        %465 = vrot.lane.b32.xlu0 %v450, 4
        %v466 = vpop.permute.xlu0 %465
        %v468 = vmul.f32 %v449, %v466
        %470 = vrot.lane.b32.xlu0 %v468, 124
        %v471 = vpop.permute.xlu0 %470
        %v473 = vadd.f32 %v463, %v471
        %475 = vrot.lane.b32.xlu0 %v473, 4
        %v476 = vpop.permute.xlu0 %475
        %vm478 = vcmask 31744
        %v479 = vsel %vm478, %v462, %v476
        %v480 = vmul.f32 %v479, 0.35355338
        %481 = vst.msk [vmem:[#allocation5] sm:$0xff] %vm447, %v480
      $region52: #{causal_self_attention_rope.4} parent=47 // pred_fallthru
        _
      %p482 = scmp.le.s32.totalorder %s439, %s436
      %p483 = scmp.le.s32.totalorder %s438, %s437
      %p484 = scmp.gt.s32.totalorder %s439, %s436
      %p485 = pnand %p483, %p484
      %p486 = pneg %p485
      // Predicated region
      $region53: #{causal_self_attention_rope.4} parent=47 // pred_check
        %p487 = pneg %p482
      $region54: #{causal_self_attention_rope.4} parent=47 // pred_check_branch
        %489 = sbr.rel (%p487) target = $region56
      $region55: #{causal_self_attention_rope.4} parent=47 // pred_region
        %v490 = vld [vmem:[%s405] sm:$0xff]
        %v491 = vld [vmem:[%s428] sm:$0xff]
        %v492 = vld [vmem:[%s424] sm:$0xff]
        %v493 = vmul.f32 %v490, %v491
        %495 = vrot.lane.b32.xlu0 %v492, 4
        %v496 = vpop.permute.xlu0 %495
        %v498 = vmul.f32 %v490, %v496
        %500 = vrot.lane.b32.xlu0 %v498, 124
        %v501 = vpop.permute.xlu0 %500
        %v503 = vsub.f32 %v493, %v501
        %v504 = vmul.f32 %v490, %v492
        %506 = vrot.lane.b32.xlu0 %v491, 4
        %v507 = vpop.permute.xlu0 %506
        %v509 = vmul.f32 %v490, %v507
        %511 = vrot.lane.b32.xlu0 %v509, 124
        %v512 = vpop.permute.xlu0 %511
        %v514 = vadd.f32 %v504, %v512
        %516 = vrot.lane.b32.xlu0 %v514, 4
        %v517 = vpop.permute.xlu0 %516
        %vm519 = vcmask 31744
        %v520 = vsel %vm519, %v503, %v517
        %v521 = vld [vmem:[#allocation5] sm:$0xff]
        %vm522 = vcmask 64512
        %v524 = vsel %vm522, %v521, 0
        %v527 = vsel %vm522, %v520, 0
        %529 = vmatpush.xpose.msra.mxu0 0.0
        %530 = vmatpush.xpose.msra.mxu0 0.0
        %531 = vmatpush.xpose.msra.mxu0 0.0
        %532 = vmatpush.xpose.msra.mxu0 0.0
        %533 = vmatpush.xpose.msra.mxu0 0.0
        %534 = vmatpush.xpose.msra.mxu0 0.0
        %535 = vmatpush.xpose.msra.mxu0 0.0
        %536 = vmatpush.xpose.msra.mxu0 0.0
        %537 = vmatpush.xpose.msra.mxu0 0.0
        %538 = vmatpush.xpose.msra.mxu0 0.0
        %539 = vmatpush.xpose.msra.mxu0 0.0
        %540 = vmatpush.xpose.msra.mxu0 0.0
        %541 = vmatpush.xpose.msra.mxu0 0.0
        %542 = vmatpush.xpose.msra.mxu0 0.0
        %543 = vmatpush.xpose.msra.mxu0 0.0
        %544 = vmatpush.xpose.msra.mxu0 %v527
        %545 = vmatmul.f32.gmra.mxu0 %v524
        %v546 = vpop.f32.mrf.mxu0
        %v547 = vadd.f32 0.0, %v546
        %548 = vdwg.mxu0
        %v549 = vld [vmem:[#allocation2] sm:$0xff]
        %v550 = vsel %vm522, %v547, -inf
        %551 = vmax.xlane.f32.xlu0 %v550
        %v552 = vpop.xlane.xlu0 %551
        %v553 = vmax.f32 %v549, %v552
        %v554 = vsub.f32 %v549, %v553
        %v555 = vmul.f32 %v554, 1.442695
        %v556 = vpow.pop %v555
        %558 = vset.pattern.permute.xlu0 0
        %559 = vperm.xlu0 %558, %v553
        %v560 = vpop.permute.xlu0 %559
        %v562 = vsub.f32 %v547, %v560
        %v563 = vmul.f32 %v562, 1.442695
        %v564 = vpow.pop %v563
        %v565 = vld [vmem:[#allocation3] sm:$0xff]
        %v566 = vmul.f32 %v556, %v565
        %v567 = vsel %vm522, %v564, 0.0
        %568 = vadd.xlane.f32.xlu0 %v567
        %v569 = vpop.xlane.xlu0 %568
        %v570 = vadd.f32 %v566, %v569
        %vm571 = vcmask 7168
        %572 = vst.msk [vmem:[#allocation3] sm:$0xff] %vm571, %v570
        %v573 = vld [vmem:[#allocation4] sm:$0xff]
        %575 = vset.pattern.permute.xlu0 0
        %576 = vperm.xlu0 %575, %v556
        %v577 = vpop.permute.xlu0 %576
        %v579 = vmul.f32 %v577, %v573
        %v580 = vld [vmem:[%s412] sm:$0xff]
        %v582 = vsel %vm522, %v564, 0
        %584 = vmatpush.msra.mxu0 0.0
        %585 = vmatpush.msra.mxu0 0.0
        %586 = vmatpush.msra.mxu0 0.0
        %587 = vmatpush.msra.mxu0 0.0
        %588 = vmatpush.msra.mxu0 0.0
        %589 = vmatpush.msra.mxu0 0.0
        %590 = vmatpush.msra.mxu0 0.0
        %591 = vmatpush.msra.mxu0 0.0
        %592 = vmatpush.msra.mxu0 0.0
        %593 = vmatpush.msra.mxu0 0.0
        %594 = vmatpush.msra.mxu0 0.0
        %595 = vmatpush.msra.mxu0 0.0
        %596 = vmatpush.msra.mxu0 0.0
        %597 = vmatpush.msra.mxu0 0.0
        %598 = vmatpush.msra.mxu0 0.0
        %599 = vmatpush.msra.mxu0 %v580
        %600 = vmatmul.f32.gmra.mxu0 %v582
        %v601 = vpop.f32.mrf.mxu0
        %v602 = vadd.f32 0.0, %v601
        %603 = vdwg.mxu0
        %v604 = vadd.f32 %v579, %v602
        %605 = vst.msk [vmem:[#allocation4] sm:$0xff] %vm522, %v604
        %606 = vst.msk [vmem:[#allocation2] sm:$0xff] %vm571, %v553
      $region56: #{causal_self_attention_rope.4} parent=47 // pred_fallthru
        _
      // Predicated region
      $region57: #{causal_self_attention_rope.4} parent=47 // pred_check
        _
      $region58: #{causal_self_attention_rope.4} parent=47 // pred_check_branch
        %608 = sbr.rel (%p485) target = $region60
      $region59: #{causal_self_attention_rope.4} parent=47 // pred_region
        %v609 = vld [vmem:[%s405] sm:$0xff]
        %v610 = vld [vmem:[%s428] sm:$0xff]
        %v611 = vld [vmem:[%s424] sm:$0xff]
        %v612 = vmul.f32 %v609, %v610
        %614 = vrot.lane.b32.xlu0 %v611, 4
        %v615 = vpop.permute.xlu0 %614
        %v617 = vmul.f32 %v609, %v615
        %619 = vrot.lane.b32.xlu0 %v617, 124
        %v620 = vpop.permute.xlu0 %619
        %v622 = vsub.f32 %v612, %v620
        %v623 = vmul.f32 %v609, %v611
        %625 = vrot.lane.b32.xlu0 %v610, 4
        %v626 = vpop.permute.xlu0 %625
        %v628 = vmul.f32 %v609, %v626
        %630 = vrot.lane.b32.xlu0 %v628, 124
        %v631 = vpop.permute.xlu0 %630
        %v633 = vadd.f32 %v623, %v631
        %635 = vrot.lane.b32.xlu0 %v633, 4
        %v636 = vpop.permute.xlu0 %635
        %vm638 = vcmask 31744
        %v639 = vsel %vm638, %v622, %v636
        %v640 = vld [vmem:[#allocation5] sm:$0xff]
        %vm641 = vcmask 64512
        %v643 = vsel %vm641, %v640, 0
        %v646 = vsel %vm641, %v639, 0
        %648 = vmatpush.xpose.msra.mxu0 0.0
        %649 = vmatpush.xpose.msra.mxu0 0.0
        %650 = vmatpush.xpose.msra.mxu0 0.0
        %651 = vmatpush.xpose.msra.mxu0 0.0
        %652 = vmatpush.xpose.msra.mxu0 0.0
        %653 = vmatpush.xpose.msra.mxu0 0.0
        %654 = vmatpush.xpose.msra.mxu0 0.0
        %655 = vmatpush.xpose.msra.mxu0 0.0
        %656 = vmatpush.xpose.msra.mxu0 0.0
        %657 = vmatpush.xpose.msra.mxu0 0.0
        %658 = vmatpush.xpose.msra.mxu0 0.0
        %659 = vmatpush.xpose.msra.mxu0 0.0
        %660 = vmatpush.xpose.msra.mxu0 0.0
        %661 = vmatpush.xpose.msra.mxu0 0.0
        %662 = vmatpush.xpose.msra.mxu0 0.0
        %663 = vmatpush.xpose.msra.mxu0 %v646
        %664 = vmatmul.f32.gmra.mxu0 %v643
        %v665 = vpop.f32.mrf.mxu0
        %v666 = vadd.f32 0.0, %v665
        %667 = vdwg.mxu0
        %v668 = vlaneseq
        %v669 = vshrl.u32 %v668, 7
        %v670 = vstv %s436
        %v671 = vadd.s32 %v670, %v669
        %v672 = vlaneseq
        %v673 = vand.u32 %v672, 127
        %v674 = vstv %s438
        %v675 = vadd.s32 %v674, %v673
        %vm676 = vcmp.le.s32.totalorder %v675, %v671
        %v677 = vsel %vm676, %v666, -1e+30
        %v678 = vld [vmem:[#allocation2] sm:$0xff]
        %v679 = vsel %vm641, %v677, -inf
        %680 = vmax.xlane.f32.xlu0 %v679
        %v681 = vpop.xlane.xlu0 %680
        %v682 = vmax.f32 %v678, %v681
        %v683 = vsub.f32 %v678, %v682
        %v684 = vmul.f32 %v683, 1.442695
        %v685 = vpow.pop %v684
        %687 = vset.pattern.permute.xlu0 0
        %688 = vperm.xlu0 %687, %v682
        %v689 = vpop.permute.xlu0 %688
        %v691 = vsub.f32 %v677, %v689
        %v692 = vmul.f32 %v691, 1.442695
        %v693 = vpow.pop %v692
        %v694 = vld [vmem:[#allocation3] sm:$0xff]
        %v695 = vmul.f32 %v685, %v694
        %v696 = vsel %vm641, %v693, 0.0
        %697 = vadd.xlane.f32.xlu0 %v696
        %v698 = vpop.xlane.xlu0 %697
        %v699 = vadd.f32 %v695, %v698
        %vm700 = vcmask 7168
        %701 = vst.msk [vmem:[#allocation3] sm:$0xff] %vm700, %v699
        %v702 = vld [vmem:[#allocation4] sm:$0xff]
        %704 = vset.pattern.permute.xlu0 0
        %705 = vperm.xlu0 %704, %v685
        %v706 = vpop.permute.xlu0 %705
        %v708 = vmul.f32 %v706, %v702
        %v709 = vld [vmem:[%s412] sm:$0xff]
        %v711 = vsel %vm641, %v693, 0
        %713 = vmatpush.msra.mxu0 0.0
        %714 = vmatpush.msra.mxu0 0.0
        %715 = vmatpush.msra.mxu0 0.0
        %716 = vmatpush.msra.mxu0 0.0
        %717 = vmatpush.msra.mxu0 0.0
        %718 = vmatpush.msra.mxu0 0.0
        %719 = vmatpush.msra.mxu0 0.0
        %720 = vmatpush.msra.mxu0 0.0
        %721 = vmatpush.msra.mxu0 0.0
        %722 = vmatpush.msra.mxu0 0.0
        %723 = vmatpush.msra.mxu0 0.0
        %724 = vmatpush.msra.mxu0 0.0
        %725 = vmatpush.msra.mxu0 0.0
        %726 = vmatpush.msra.mxu0 0.0
        %727 = vmatpush.msra.mxu0 0.0
        %728 = vmatpush.msra.mxu0 %v709
        %729 = vmatmul.f32.gmra.mxu0 %v711
        %v730 = vpop.f32.mrf.mxu0
        %v731 = vadd.f32 0.0, %v730
        %732 = vdwg.mxu0
        %v733 = vadd.f32 %v708, %v731
        %734 = vst.msk [vmem:[#allocation4] sm:$0xff] %vm641, %v733
        %735 = vst.msk [vmem:[#allocation2] sm:$0xff] %vm700, %v682
      $region60: #{causal_self_attention_rope.4} parent=47 // pred_fallthru
        _
      // Predicated region
      $region61: #{causal_self_attention_rope.4} parent=47 // pred_check
        %p736 = pneg %p440
      $region62: #{causal_self_attention_rope.4} parent=47 // pred_check_branch
        %738 = sbr.rel (%p736) target = $region64
      $region63: #{causal_self_attention_rope.4} parent=47 // pred_region
        %v739 = vld [vmem:[#allocation3] sm:$0xff]
        %v740 = vrcp.pop %v739
        %v741 = vmul.f32 %v739, %v740
        %v742 = vsub.f32 1.0, %v741
        %v743 = vmul.f32 %v740, %v742
        %v744 = vadd.f32 %v740, %v743
        %vm745 = vweird.f32 %v739
        %vm746 = vweird.f32 %v740
        %vm747 = vmor %vm745, %vm746
        %v748 = vsel %vm747, %v740, %v744
        %v749 = vand.u32 2147483647, %v739
        %vm750 = vcmp.eq.f32.partialorder %v749, 8.507059e+37
        %v751 = vand.u32 %v739, 2147483648
        %v752 = vor.u32 1.1754944e-38, %v751
        %v753 = vsel %vm750, %v752, %v748
        %v754 = vld [vmem:[#allocation4] sm:$0xff]
        %756 = vset.pattern.permute.xlu0 0
        %757 = vperm.xlu0 %756, %v753
        %v758 = vpop.permute.xlu0 %757
        %v760 = vmul.f32 %v754, %v758
        %vm761 = vcmask 64512
        %762 = vst.msk [vmem:[%s435] sm:$0xff] %vm761, %v760
      $region64: #{causal_self_attention_rope.4} parent=47 // pred_fallthru
        _
      %p763 = scmp.lt.s32.totalorder %s23, 7
      %s764 = scalar_select %p763, %s23, 7
      %p765 = scmp.lt.s32.totalorder %s24, 0
      %s766 = scalar_select %p765, %s24, 0
      %s767 = sadd.s32 %s766, %s764
      %s768 = smul.addr %s767, 8
      %s769 = scalar_lea.vmem %s7, %s768
      // Predicated region
      $region65: #{causal_self_attention_rope.4} parent=47 // pred_check
        %p770 = pneg %p245
      $region66: #{causal_self_attention_rope.4} parent=47 // pred_check_branch
        %772 = sbr.rel (%p770) target = $region68
      $region67: #{causal_self_attention_rope.4} parent=47 // pred_region
        _
      $region68: #{causal_self_attention_rope.4} parent=47 // pred_fallthru
        _
    $region48: #{causal_self_attention_rope.4} parent=5 // pred_fallthru
      _
    %p773 = scmp.le.s32.totalorder 2, %s13
    // Predicated region
    $region69: #{causal_self_attention_rope.4} parent=5 // pred_check
      %p774 = pneg %p773
    $region70: #{causal_self_attention_rope.4} parent=5 // pred_check_branch
      %776 = sbr.rel (%p774) target = $region72
    $region71: #{causal_self_attention_rope.4} parent=5 // pred_region
      %s777 = ssub.s32 %s13, 2
      // Predicated region
      $region73: #{causal_self_attention_rope.4} parent=71 // pred_check
        %p778 = pneg %p251
      $region74: #{causal_self_attention_rope.4} parent=71 // pred_check_branch
        %780 = sbr.rel (%p778) target = $region76
      $region75: #{causal_self_attention_rope.4} parent=71 // pred_region
        %p781 = scmp.lt.s32.totalorder %s26, 7
        %s782 = scalar_select %p781, %s26, 7
        %p783 = scmp.lt.s32.totalorder %s27, 0
        %s784 = scalar_select %p783, %s27, 0
        %s785 = sadd.s32 %s784, %s782
        %s786 = smul.addr %s785, 8
        %s787 = scalar_lea.vmem %s7, %s786
      $region76: #{causal_self_attention_rope.4} parent=71 // pred_fallthru
        _
    $region72: #{causal_self_attention_rope.4} parent=5 // pred_fallthru
      _
  $region6: #{causal_self_attention_rope.4} parent=0 // loop_footer
    %s17 = sadd.s32 1, %s13
  $region7: #{causal_self_attention_rope.4} parent=0 // loop_footer_branch
    %12 = sbr.rel target = $region3
  $region8: #{causal_self_attention_rope.4} parent=0 // loop_exit
    _

</llo_original>
